<compile_context>
chip_gen: v5e
topology: v5e:2x2
jax: 0.10.0
libtpu: 0.0.40
codegen_flags: <defaults>
</compile_context>

<pallas_src>
import math

import jax
import jax.numpy as jnp
from jax.experimental import pallas as pl
from jax.experimental.pallas import tpu as pltpu  # noqa: F401

# ---------------- model dims (small, consistent with the module) -------------
B = 2          # batch
S = 8          # target sequence length
SE = 8         # encoder (source) sequence length
D = 32         # d_model
H = 4          # num_heads
HD = D // H    # head_dim
DFF = 64       # d_ff
EPS = 1e-5     # nn.LayerNorm default eps
SCALE = 1.0 / math.sqrt(float(HD))

# packed weight-slab column offsets (all weight blocks have D input rows)
_C_QKV1 = 0                 # self-attn packed Wq|Wk|Wv : (D, 3D) padded to 128
_QKV1_W = 128
_C_WO1 = _C_QKV1 + _QKV1_W  # self-attn output proj     : (D, D)      -> 128
_C_WQ2 = _C_WO1 + D         # cross-attn Wq             : (D, D)      -> 160
_C_KV2 = _C_WQ2 + D         # cross-attn packed Wk|Wv   : (D, 2D)     -> 192
_C_WO2 = _C_KV2 + 2 * D     # cross-attn output proj    : (D, D)      -> 256
_C_W1 = _C_WO2 + D          # FFN fc1                   : (D, DFF)    -> 288
W_COLS = 384                # 352 real columns, padded to 3 * 128

# vector-slab rows (each row padded to 128 lanes)
(_R_BQKV1, _R_BO1, _R_BQ2, _R_BKV2, _R_BO2, _R_B1, _R_B2,
 _R_G1, _R_BE1, _R_G2, _R_BE2, _R_G3, _R_BE3) = range(13)
V_ROWS = 16   # padded to a multiple of 8 sublanes


# ---------------- in-kernel math helpers (traced into the kernel) ------------
def _attention(q2d, k2d, v2d, sq, skv, head_rows):
    """Multi-head attention on (B*s, D) projections (q already pre-scaled).

    Uses a block-diagonal head expansion of Q along the sublane axis so the
    score contraction is the full D dim (one wide batched dot_general) and no
    lane-dim slicing / cross-lane shuffles are needed.
    """
    q3 = q2d.reshape(B, sq, D)
    k3 = k2d.reshape(B, skv, D)
    v3 = v2d.reshape(B, skv, D)

    # q_exp[b, h*sq + i, :] = q3[b, i, :] * head_mask[h, :]   (sublane stacking)
    q_exp = jnp.concatenate([q3 * head_rows[h] for h in range(H)], axis=1)

    # per-head scores via ONE batched matmul (contraction depth D, not HD)
    s = jnp.einsum("bqd,bkd->bqk", q_exp, k3,
                   preferred_element_type=jnp.float32)          # (B, H*sq, skv)
    s = s - jnp.max(s, axis=-1, keepdims=True)                  # stable softmax
    p = jnp.exp(s)
    p = p / jnp.sum(p, axis=-1, keepdims=True)                  # exact divide

    o_exp = jnp.einsum("bqk,bkd->bqd", p, v3,
                       preferred_element_type=jnp.float32)      # (B, H*sq, D)

    # head recombination: out[b, i, d] = o_exp[b, head(d)*sq + i, d]
    # (aligned sublane-block slices * lane masks; pure VPU)
    o = o_exp[:, 0:sq, :] * head_rows[0]
    for h in range(1, H):
        o = o + o_exp[:, h * sq:(h + 1) * sq, :] * head_rows[h]
    return o.reshape(B * sq, D)


def _layer_norm(x, gamma, beta):
    mu = jnp.mean(x, axis=-1, keepdims=True)
    d = x - mu
    var = jnp.mean(d * d, axis=-1, keepdims=True)       # biased, like PyTorch
    return d * jax.lax.rsqrt(var + EPS) * gamma + beta


# ---------------- the Pallas kernel ------------------------------------------
def decoder_layer_kernel(x_ref, enc_ref, w_ref, w2_ref, vec_ref, o_ref):
    x = x_ref[...]            # (B*S, D)
    enc = enc_ref[...]        # (B*SE, D)
    W = w_ref[...]            # (D, W_COLS)
    W2 = w2_ref[...]          # (DFF, D)
    V = vec_ref[...]          # (V_ROWS, 128)

    # head-selection masks built with iota/compare only (no integer division)
    d_idx = jax.lax.broadcasted_iota(jnp.int32, (H, D), 1)
    h_idx = jax.lax.broadcasted_iota(jnp.int32, (H, D), 0)
    head_mask = ((d_idx >= h_idx * HD) &
                 (d_idx < (h_idx + 1) * HD)).astype(jnp.float32)   # (H, D)
    head_rows = tuple(head_mask[h:h + 1, :] for h in range(H))     # H x (1, D)

    # hoist all parameter views once (no re-slicing inside the math)
    Wqkv1 = W[:, _C_QKV1:_C_QKV1 + _QKV1_W]     # (D, 128), cols 96:128 are zero
    Wo1 = W[:, _C_WO1:_C_WO1 + D]
    Wq2 = W[:, _C_WQ2:_C_WQ2 + D]
    Wkv2 = W[:, _C_KV2:_C_KV2 + 2 * D]
    Wo2 = W[:, _C_WO2:_C_WO2 + D]
    W1 = W[:, _C_W1:_C_W1 + DFF]

    bqkv1 = V[_R_BQKV1:_R_BQKV1 + 1, :]         # full 128-lane padded row
    bo1 = V[_R_BO1:_R_BO1 + 1, :D]
    bq2 = V[_R_BQ2:_R_BQ2 + 1, :D]
    bkv2 = V[_R_BKV2:_R_BKV2 + 1, :2 * D]
    bo2 = V[_R_BO2:_R_BO2 + 1, :D]
    b1 = V[_R_B1:_R_B1 + 1, :DFF]
    b2 = V[_R_B2:_R_B2 + 1, :D]
    g1 = V[_R_G1:_R_G1 + 1, :D]
    be1 = V[_R_BE1:_R_BE1 + 1, :D]
    g2 = V[_R_G2:_R_G2 + 1, :D]
    be2 = V[_R_BE2:_R_BE2 + 1, :D]
    g3 = V[_R_G3:_R_G3 + 1, :D]
    be3 = V[_R_BE3:_R_BE3 + 1, :D]

    # ---- self-attention + residual + norm1 (dropout == identity, eval) ----
    qkv = jnp.dot(x, Wqkv1, preferred_element_type=jnp.float32) + bqkv1  # (BS,128)
    attn = _attention(qkv[:, 0:D], qkv[:, D:2 * D], qkv[:, 2 * D:3 * D],
                      S, S, head_rows)
    attn = jnp.dot(attn, Wo1, preferred_element_type=jnp.float32) + bo1
    x = _layer_norm(x + attn, g1, be1)

    # ---- cross-attention + residual + norm2 ----
    q = jnp.dot(x, Wq2, preferred_element_type=jnp.float32) + bq2        # (BS,D)
    kv = jnp.dot(enc, Wkv2, preferred_element_type=jnp.float32) + bkv2   # (BSE,2D)
    attn = _attention(q, kv[:, 0:D], kv[:, D:2 * D], S, SE, head_rows)
    attn = jnp.dot(attn, Wo2, preferred_element_type=jnp.float32) + bo2
    x = _layer_norm(x + attn, g2, be2)

    # ---- feed-forward + residual + norm3 ----
    hdn = jnp.maximum(jnp.dot(x, W1, preferred_element_type=jnp.float32) + b1, 0.0)
    ff = jnp.dot(hdn, W2, preferred_element_type=jnp.float32) + b2
    x = _layer_norm(x + ff, g3, be3)

    o_ref[...] = x.astype(o_ref.dtype)


# ---------------- wrapper -----------------------------------------------------
def decoder_layer(x, enc_output, packed_params):
    """x: (B, S, D), enc_output: (B, SE, D) -> (B, S, D)."""
    w_slab, w2, vec_slab = packed_params
    x2d = x.reshape(B * S, D)
    enc2d = enc_output.reshape(B * SE, D)

    flops = 2 * (
        (B * S) * D * 3 * D                 # self-attn fused QKV proj
        + B * (H * S) * D * S               # self scores (block-diag, depth D)
        + B * (H * S) * S * D               # self PV
        + (B * S) * D * D                   # self-attn out proj
        + (B * S) * D * D                   # cross-attn Q proj
        + (B * SE) * D * 2 * D              # cross-attn fused KV proj
        + B * (H * S) * D * SE              # cross scores
        + B * (H * S) * SE * D              # cross PV
        + (B * S) * D * D                   # cross-attn out proj
        + (B * S) * D * DFF + (B * S) * DFF * D)   # FFN
    transcendentals = B * H * S * (S + SE) + 3 * (B * S)
    bytes_accessed = 4 * (2 * B * S * D + B * SE * D
                          + D * W_COLS + DFF * D + V_ROWS * 128)

    out2d = pl.pallas_call(
        decoder_layer_kernel,
        out_shape=jax.ShapeDtypeStruct((B * S, D), jnp.float32),
        cost_estimate=pl.CostEstimate(
            flops=flops, transcendentals=transcendentals,
            bytes_accessed=bytes_accessed),
    )(x2d, enc2d, w_slab, w2, vec_slab)
    return out2d.reshape(B, S, D)


# ---------------- deterministic parameter construction ------------------------
def make_params(key):
    keys = iter(jax.random.split(key, 64))
    nk = lambda: next(keys)

    def linear(din, dout):
        w = jax.random.normal(nk(), (din, dout), jnp.float32) * 0.05
        b = jax.random.normal(nk(), (1, dout), jnp.float32) * 0.05
        return w, b

    params = []
    for _ in range(4):                      # self-attn: wq, wk, wv, fc
        w, b = linear(D, D)
        params += [w, b]
    for _ in range(4):                      # cross-attn: wq, wk, wv, fc
        w, b = linear(D, D)
        params += [w, b]
    w1, b1 = linear(D, DFF)                 # feed-forward
    w2, b2 = linear(DFF, D)
    params += [w1, b1, w2, b2]
    for _ in range(3):                      # layer norms (fresh nn.LayerNorm)
        params += [jnp.ones((1, D), jnp.float32), jnp.zeros((1, D), jnp.float32)]
    return params


def pack_params(params):
    """Pack the 26 tensors into 3 kernel inputs (scale folded, lane-padded)."""
    (wq1, bq1, wk1, bk1, wv1, bv1, wo1, bo1,
     wq2, bq2, wk2, bk2, wv2, bv2, wo2, bo2,
     w1, b1, w2, b2, g1, be1, g2, be2, g3, be3) = params

    # fold 1/sqrt(head_dim) into the query projections (weights + biases)
    wq1s, bq1s = wq1 * SCALE, bq1 * SCALE
    wq2s, bq2s = wq2 * SCALE, bq2 * SCALE

    def pad_cols(w, width):
        out = jnp.zeros((D, width), jnp.float32)
        return out.at[:, :w.shape[1]].set(w)

    w_slab = jnp.concatenate([
        pad_cols(jnp.concatenate([wq1s, wk1, wv1], axis=1), _QKV1_W),  # 0:128
        wo1,                                        # 128:160
        wq2s,                                       # 160:192
        jnp.concatenate([wk2, wv2], axis=1),        # 192:256
        wo2,                                        # 256:288
        w1,                                         # 288:352
        jnp.zeros((D, W_COLS - (_C_W1 + DFF)), jnp.float32),           # 352:384
    ], axis=1)                                      # (D, 384)
    assert w_slab.shape == (D, W_COLS)

    def row(v, width):
        r = jnp.zeros((1, 128), jnp.float32)
        return r.at[:, :width].set(v.reshape(1, width))

    vec_rows = [
        row(jnp.concatenate([bq1s, bk1, bv1], axis=1), 3 * D),
        row(bo1, D), row(bq2s, D),
        row(jnp.concatenate([bk2, bv2], axis=1), 2 * D),
        row(bo2, D), row(b1, DFF), row(b2, D),
        row(g1, D), row(be1, D), row(g2, D), row(be2, D), row(g3, D), row(be3, D),
    ]
    vec_slab = jnp.concatenate(
        vec_rows + [jnp.zeros((V_ROWS - len(vec_rows), 128), jnp.float32)], axis=0)

    return w_slab, w2, vec_slab


# ---------------- pure-JAX reference (for a sanity check) --------------------
def reference(x, enc, params):
    (wq1, bq1, wk1, bk1, wv1, bv1, wo1, bo1,
     wq2, bq2, wk2, bk2, wv2, bv2, wo2, bo2,
     w1, b1, w2, b2, g1, be1, g2, be2, g3, be3) = params

    def mha(q_in, kv_in, wq, bq, wk, bk, wv, bv, wo, bo):
        Q = q_in @ wq + bq
        K = kv_in @ wk + bk
        V = kv_in @ wv + bv
        Bq, Sq, _ = Q.shape
        Skv = K.shape[1]
        Qh = Q.reshape(Bq, Sq, H, HD).transpose(0, 2, 1, 3)
        Kh = K.reshape(Bq, Skv, H, HD).transpose(0, 2, 1, 3)
        Vh = V.reshape(Bq, Skv, H, HD).transpose(0, 2, 1, 3)
        s = jnp.einsum("bhqd,bhkd->bhqk", Qh, Kh) / math.sqrt(float(HD))
        p = jax.nn.softmax(s, axis=-1)
        o = jnp.einsum("bhqk,bhkd->bhqd", p, Vh)
        o = o.transpose(0, 2, 1, 3).reshape(Bq, Sq, D)
        return o @ wo + bo

    def ln(v, g, be):
        mu = jnp.mean(v, axis=-1, keepdims=True)
        var = jnp.mean((v - mu) ** 2, axis=-1, keepdims=True)
        return (v - mu) * jax.lax.rsqrt(var + EPS) * g + be

    h = ln(x + mha(x, x, wq1, bq1, wk1, bk1, wv1, bv1, wo1, bo1), g1, be1)
    h = ln(h + mha(h, enc, wq2, bq2, wk2, bk2, wv2, bv2, wo2, bo2), g2, be2)
    ff = jnp.maximum(h @ w1 + b1, 0.0) @ w2 + b2
    return ln(h + ff, g3, be3)


if __name__ == "__main__":
    key = jax.random.PRNGKey(0)
    kx, ke, kp = jax.random.split(key, 3)
    x = jax.random.normal(kx, (B, S, D), jnp.float32)
    enc = jax.random.normal(ke, (B, SE, D), jnp.float32)
    params = make_params(kp)
    packed = pack_params(params)

    out = jax.jit(decoder_layer)(x, enc, packed)
    out = jax.block_until_ready(out)

    with jax.default_matmul_precision("float32"):
        ref = reference(x, enc, params)
    assert out.shape == (B, S, D)
    err = jnp.max(jnp.abs(out - ref))
    # exact softmax divide in the kernel -> tolerance tightened from 5e-3
    assert jnp.allclose(out, ref, atol=1e-3, rtol=1e-3), f"max diff {err}"
    print("KERNEL_OK")
</pallas_src>

<mosaic_0001>
module attributes {stable_mosaic.version = 11 : i64} {
  func.func @decoder_layer_kernel(%arg0: memref<16x32xf32, #tpu.memory_space<vmem>>, %arg1: memref<16x32xf32, #tpu.memory_space<vmem>>, %arg2: memref<32x384xf32, #tpu.memory_space<vmem>>, %arg3: memref<64x32xf32, #tpu.memory_space<vmem>>, %arg4: memref<16x128xf32, #tpu.memory_space<vmem>>, %arg5: memref<16x32xf32, #tpu.memory_space<vmem>>) attributes {dimension_semantics = [], scalar_prefetch = 0 : i64, scratch_operands = 0 : i64, tpu.core_type = #tpu.core_type<tc>} {
    %c0 = arith.constant 0 : index
    %c0_0 = arith.constant 0 : index
    %0 = vector.load %arg0[%c0, %c0_0] : memref<16x32xf32, #tpu.memory_space<vmem>>, vector<16x32xf32>
    %c0_1 = arith.constant 0 : index
    %c0_2 = arith.constant 0 : index
    %1 = vector.load %arg1[%c0_1, %c0_2] : memref<16x32xf32, #tpu.memory_space<vmem>>, vector<16x32xf32>
    %c0_3 = arith.constant 0 : index
    %c0_4 = arith.constant 0 : index
    %2 = vector.load %arg2[%c0_3, %c0_4] : memref<32x384xf32, #tpu.memory_space<vmem>>, vector<32x384xf32>
    %c0_5 = arith.constant 0 : index
    %c0_6 = arith.constant 0 : index
    %3 = vector.load %arg3[%c0_5, %c0_6] : memref<64x32xf32, #tpu.memory_space<vmem>>, vector<64x32xf32>
    %c0_7 = arith.constant 0 : index
    %c0_8 = arith.constant 0 : index
    %4 = vector.load %arg4[%c0_7, %c0_8] : memref<16x128xf32, #tpu.memory_space<vmem>>, vector<16x128xf32>
    %5 = tpu.iota {dimensions = array<i32: 1>} : vector<4x32xi32>
    %6 = tpu.iota {dimensions = array<i32: 0>} : vector<4x32xi32>
    %c8_i32 = arith.constant 8 : i32
    %7 = vector.broadcast %c8_i32 : i32 to vector<4x32xi32>
    %8 = arith.muli %6, %7 : vector<4x32xi32>
    %9 = arith.cmpi sge, %5, %8 : vector<4x32xi32>
    %c1_i32 = arith.constant 1 : i32
    %10 = vector.broadcast %c1_i32 : i32 to vector<4x32xi32>
    %11 = arith.addi %6, %10 : vector<4x32xi32>
    %c8_i32_9 = arith.constant 8 : i32
    %12 = vector.broadcast %c8_i32_9 : i32 to vector<4x32xi32>
    %13 = arith.muli %11, %12 : vector<4x32xi32>
    %14 = arith.cmpi slt, %5, %13 : vector<4x32xi32>
    %15 = arith.andi %9, %14 : vector<4x32xi1>
    %16 = arith.extui %15 : vector<4x32xi1> to vector<4x32xi32>
    %17 = arith.sitofp %16 : vector<4x32xi32> to vector<4x32xf32>
    %18 = vector.extract_strided_slice %17 {offsets = [0, 0], sizes = [1, 32], strides = [1, 1]} : vector<4x32xf32> to vector<1x32xf32>
    %19 = vector.extract_strided_slice %17 {offsets = [1, 0], sizes = [1, 32], strides = [1, 1]} : vector<4x32xf32> to vector<1x32xf32>
    %20 = vector.extract_strided_slice %17 {offsets = [2, 0], sizes = [1, 32], strides = [1, 1]} : vector<4x32xf32> to vector<1x32xf32>
    %21 = vector.extract_strided_slice %17 {offsets = [3, 0], sizes = [1, 32], strides = [1, 1]} : vector<4x32xf32> to vector<1x32xf32>
    %22 = vector.extract_strided_slice %2 {offsets = [0, 0], sizes = [32, 128], strides = [1, 1]} : vector<32x384xf32> to vector<32x128xf32>
    %23 = vector.extract_strided_slice %2 {offsets = [0, 128], sizes = [32, 32], strides = [1, 1]} : vector<32x384xf32> to vector<32x32xf32>
    %24 = vector.extract_strided_slice %2 {offsets = [0, 160], sizes = [32, 32], strides = [1, 1]} : vector<32x384xf32> to vector<32x32xf32>
    %25 = vector.extract_strided_slice %2 {offsets = [0, 192], sizes = [32, 64], strides = [1, 1]} : vector<32x384xf32> to vector<32x64xf32>
    %26 = vector.extract_strided_slice %2 {offsets = [0, 256], sizes = [32, 32], strides = [1, 1]} : vector<32x384xf32> to vector<32x32xf32>
    %27 = vector.extract_strided_slice %2 {offsets = [0, 288], sizes = [32, 64], strides = [1, 1]} : vector<32x384xf32> to vector<32x64xf32>
    %28 = vector.extract_strided_slice %4 {offsets = [0, 0], sizes = [1, 128], strides = [1, 1]} : vector<16x128xf32> to vector<1x128xf32>
    %29 = vector.extract_strided_slice %4 {offsets = [1, 0], sizes = [1, 32], strides = [1, 1]} : vector<16x128xf32> to vector<1x32xf32>
    %30 = vector.extract_strided_slice %4 {offsets = [2, 0], sizes = [1, 32], strides = [1, 1]} : vector<16x128xf32> to vector<1x32xf32>
    %31 = vector.extract_strided_slice %4 {offsets = [3, 0], sizes = [1, 64], strides = [1, 1]} : vector<16x128xf32> to vector<1x64xf32>
    %32 = vector.extract_strided_slice %4 {offsets = [4, 0], sizes = [1, 32], strides = [1, 1]} : vector<16x128xf32> to vector<1x32xf32>
    %33 = vector.extract_strided_slice %4 {offsets = [5, 0], sizes = [1, 64], strides = [1, 1]} : vector<16x128xf32> to vector<1x64xf32>
    %34 = vector.extract_strided_slice %4 {offsets = [6, 0], sizes = [1, 32], strides = [1, 1]} : vector<16x128xf32> to vector<1x32xf32>
    %35 = vector.extract_strided_slice %4 {offsets = [7, 0], sizes = [1, 32], strides = [1, 1]} : vector<16x128xf32> to vector<1x32xf32>
    %36 = vector.extract_strided_slice %4 {offsets = [8, 0], sizes = [1, 32], strides = [1, 1]} : vector<16x128xf32> to vector<1x32xf32>
    %37 = vector.extract_strided_slice %4 {offsets = [9, 0], sizes = [1, 32], strides = [1, 1]} : vector<16x128xf32> to vector<1x32xf32>
    %38 = vector.extract_strided_slice %4 {offsets = [10, 0], sizes = [1, 32], strides = [1, 1]} : vector<16x128xf32> to vector<1x32xf32>
    %39 = vector.extract_strided_slice %4 {offsets = [11, 0], sizes = [1, 32], strides = [1, 1]} : vector<16x128xf32> to vector<1x32xf32>
    %40 = vector.extract_strided_slice %4 {offsets = [12, 0], sizes = [1, 32], strides = [1, 1]} : vector<16x128xf32> to vector<1x32xf32>
    %cst = arith.constant dense<0.000000e+00> : vector<16x128xf32>
    %41 = tpu.matmul %0, %22, %cst {dimension_numbers = #tpu.dot_dimension_numbers<[1], [0], [0], [1], [0, 0, 1, 1], [], []>} : vector<16x32xf32>, vector<32x128xf32>, vector<16x128xf32> -> vector<16x128xf32>
    %42 = vector.broadcast %28 : vector<1x128xf32> to vector<16x128xf32>
    %43 = arith.addf %41, %42 : vector<16x128xf32>
    %44 = vector.extract_strided_slice %43 {offsets = [0, 0], sizes = [16, 32], strides = [1, 1]} : vector<16x128xf32> to vector<16x32xf32>
    %45 = vector.extract_strided_slice %43 {offsets = [0, 32], sizes = [16, 32], strides = [1, 1]} : vector<16x128xf32> to vector<16x32xf32>
    %46 = vector.extract_strided_slice %43 {offsets = [0, 64], sizes = [16, 32], strides = [1, 1]} : vector<16x128xf32> to vector<16x32xf32>
    %47 = vector.shape_cast %44 : vector<16x32xf32> to vector<2x8x32xf32>
    %48 = vector.shape_cast %45 : vector<16x32xf32> to vector<2x8x32xf32>
    %49 = vector.shape_cast %46 : vector<16x32xf32> to vector<2x8x32xf32>
    %50 = vector.shape_cast %18 : vector<1x32xf32> to vector<1x1x32xf32>
    %51 = vector.broadcast %50 : vector<1x1x32xf32> to vector<2x8x32xf32>
    %52 = arith.mulf %47, %51 : vector<2x8x32xf32>
    %53 = vector.shape_cast %19 : vector<1x32xf32> to vector<1x1x32xf32>
    %54 = vector.broadcast %53 : vector<1x1x32xf32> to vector<2x8x32xf32>
    %55 = arith.mulf %47, %54 : vector<2x8x32xf32>
    %56 = vector.shape_cast %20 : vector<1x32xf32> to vector<1x1x32xf32>
    %57 = vector.broadcast %56 : vector<1x1x32xf32> to vector<2x8x32xf32>
    %58 = arith.mulf %47, %57 : vector<2x8x32xf32>
    %59 = vector.shape_cast %21 : vector<1x32xf32> to vector<1x1x32xf32>
    %60 = vector.broadcast %59 : vector<1x1x32xf32> to vector<2x8x32xf32>
    %61 = arith.mulf %47, %60 : vector<2x8x32xf32>
    %62 = tpu.concatenate %52, %55, %58, %61 in 1 : vector<2x8x32xf32>, vector<2x8x32xf32>, vector<2x8x32xf32>, vector<2x8x32xf32> -> vector<2x32x32xf32>
    "tpu.trace_start"() <{level = 10 : i32, message = "bqd,bkd->bqk"}> : () -> ()
    %cst_10 = arith.constant dense<0.000000e+00> : vector<2x32x8xf32>
    %63 = tpu.matmul %62, %48, %cst_10 {dimension_numbers = #tpu.dot_dimension_numbers<[2], [2], [1], [1], [0, 0, 0, 1, 1, 1], [0], [0]>} : vector<2x32x32xf32>, vector<2x8x32xf32>, vector<2x32x8xf32> -> vector<2x32x8xf32>
    "tpu.trace_stop"() : () -> ()
    %cst_11 = arith.constant dense<0xFF800000> : vector<2x32xf32>
    %64 = vector.multi_reduction <maximumf>, %63, %cst_11 [2] : vector<2x32x8xf32> to vector<2x32xf32>
    %65 = vector.shape_cast %64 : vector<2x32xf32> to vector<2x32x1xf32>
    %66 = vector.broadcast %65 : vector<2x32x1xf32> to vector<2x32x8xf32>
    %67 = arith.subf %63, %66 : vector<2x32x8xf32>
    %68 = math.exp %67 : vector<2x32x8xf32>
    %cst_12 = arith.constant dense<0.000000e+00> : vector<2x32xf32>
    %69 = vector.multi_reduction <add>, %68, %cst_12 [2] : vector<2x32x8xf32> to vector<2x32xf32>
    %70 = vector.shape_cast %69 : vector<2x32xf32> to vector<2x32x1xf32>
    %71 = vector.broadcast %70 : vector<2x32x1xf32> to vector<2x32x8xf32>
    %72 = arith.divf %68, %71 : vector<2x32x8xf32>
    "tpu.trace_start"() <{level = 10 : i32, message = "bqk,bkd->bqd"}> : () -> ()
    %cst_13 = arith.constant dense<0.000000e+00> : vector<2x32x32xf32>
    %73 = tpu.matmul %72, %49, %cst_13 {dimension_numbers = #tpu.dot_dimension_numbers<[2], [1], [1], [2], [0, 0, 0, 1, 1, 2], [0], [0]>} : vector<2x32x8xf32>, vector<2x8x32xf32>, vector<2x32x32xf32> -> vector<2x32x32xf32>
    "tpu.trace_stop"() : () -> ()
    %74 = vector.extract_strided_slice %73 {offsets = [0, 0, 0], sizes = [2, 8, 32], strides = [1, 1, 1]} : vector<2x32x32xf32> to vector<2x8x32xf32>
    %75 = vector.shape_cast %18 : vector<1x32xf32> to vector<1x1x32xf32>
    %76 = vector.broadcast %75 : vector<1x1x32xf32> to vector<2x8x32xf32>
    %77 = arith.mulf %74, %76 : vector<2x8x32xf32>
    %78 = vector.extract_strided_slice %73 {offsets = [0, 8, 0], sizes = [2, 8, 32], strides = [1, 1, 1]} : vector<2x32x32xf32> to vector<2x8x32xf32>
    %79 = vector.shape_cast %19 : vector<1x32xf32> to vector<1x1x32xf32>
    %80 = vector.broadcast %79 : vector<1x1x32xf32> to vector<2x8x32xf32>
    %81 = arith.mulf %78, %80 : vector<2x8x32xf32>
    %82 = arith.addf %77, %81 : vector<2x8x32xf32>
    %83 = vector.extract_strided_slice %73 {offsets = [0, 16, 0], sizes = [2, 8, 32], strides = [1, 1, 1]} : vector<2x32x32xf32> to vector<2x8x32xf32>
    %84 = vector.shape_cast %20 : vector<1x32xf32> to vector<1x1x32xf32>
    %85 = vector.broadcast %84 : vector<1x1x32xf32> to vector<2x8x32xf32>
    %86 = arith.mulf %83, %85 : vector<2x8x32xf32>
    %87 = arith.addf %82, %86 : vector<2x8x32xf32>
    %88 = vector.extract_strided_slice %73 {offsets = [0, 24, 0], sizes = [2, 8, 32], strides = [1, 1, 1]} : vector<2x32x32xf32> to vector<2x8x32xf32>
    %89 = vector.shape_cast %21 : vector<1x32xf32> to vector<1x1x32xf32>
    %90 = vector.broadcast %89 : vector<1x1x32xf32> to vector<2x8x32xf32>
    %91 = arith.mulf %88, %90 : vector<2x8x32xf32>
    %92 = arith.addf %87, %91 : vector<2x8x32xf32>
    %93 = vector.shape_cast %92 : vector<2x8x32xf32> to vector<16x32xf32>
    %cst_14 = arith.constant dense<0.000000e+00> : vector<16x32xf32>
    %94 = tpu.matmul %93, %23, %cst_14 {dimension_numbers = #tpu.dot_dimension_numbers<[1], [0], [0], [1], [0, 0, 1, 1], [], []>} : vector<16x32xf32>, vector<32x32xf32>, vector<16x32xf32> -> vector<16x32xf32>
    %95 = vector.broadcast %29 : vector<1x32xf32> to vector<16x32xf32>
    %96 = arith.addf %94, %95 : vector<16x32xf32>
    %97 = arith.addf %0, %96 : vector<16x32xf32>
    %cst_15 = arith.constant dense<0.000000e+00> : vector<16xf32>
    %98 = vector.multi_reduction <add>, %97, %cst_15 [1] : vector<16x32xf32> to vector<16xf32>
    %99 = vector.shape_cast %98 : vector<16xf32> to vector<16x1xf32>
    %cst_16 = arith.constant 3.200000e+01 : f32
    %100 = vector.broadcast %cst_16 : f32 to vector<16x1xf32>
    %101 = arith.divf %99, %100 : vector<16x1xf32>
    %102 = vector.broadcast %101 : vector<16x1xf32> to vector<16x32xf32>
    %103 = arith.subf %97, %102 : vector<16x32xf32>
    %104 = arith.mulf %103, %103 : vector<16x32xf32>
    %cst_17 = arith.constant dense<0.000000e+00> : vector<16xf32>
    %105 = vector.multi_reduction <add>, %104, %cst_17 [1] : vector<16x32xf32> to vector<16xf32>
    %106 = vector.shape_cast %105 : vector<16xf32> to vector<16x1xf32>
    %cst_18 = arith.constant 3.200000e+01 : f32
    %107 = vector.broadcast %cst_18 : f32 to vector<16x1xf32>
    %108 = arith.divf %106, %107 : vector<16x1xf32>
    %cst_19 = arith.constant 9.99999974E-6 : f32
    %109 = vector.broadcast %cst_19 : f32 to vector<16x1xf32>
    %110 = arith.addf %108, %109 : vector<16x1xf32>
    %111 = math.rsqrt %110 : vector<16x1xf32>
    %112 = vector.broadcast %111 : vector<16x1xf32> to vector<16x32xf32>
    %113 = arith.mulf %103, %112 : vector<16x32xf32>
    %114 = vector.broadcast %35 : vector<1x32xf32> to vector<16x32xf32>
    %115 = arith.mulf %113, %114 : vector<16x32xf32>
    %116 = vector.broadcast %36 : vector<1x32xf32> to vector<16x32xf32>
    %117 = arith.addf %115, %116 : vector<16x32xf32>
    %cst_20 = arith.constant dense<0.000000e+00> : vector<16x32xf32>
    %118 = tpu.matmul %117, %24, %cst_20 {dimension_numbers = #tpu.dot_dimension_numbers<[1], [0], [0], [1], [0, 0, 1, 1], [], []>} : vector<16x32xf32>, vector<32x32xf32>, vector<16x32xf32> -> vector<16x32xf32>
    %119 = vector.broadcast %30 : vector<1x32xf32> to vector<16x32xf32>
    %120 = arith.addf %118, %119 : vector<16x32xf32>
    %cst_21 = arith.constant dense<0.000000e+00> : vector<16x64xf32>
    %121 = tpu.matmul %1, %25, %cst_21 {dimension_numbers = #tpu.dot_dimension_numbers<[1], [0], [0], [1], [0, 0, 1, 1], [], []>} : vector<16x32xf32>, vector<32x64xf32>, vector<16x64xf32> -> vector<16x64xf32>
    %122 = vector.broadcast %31 : vector<1x64xf32> to vector<16x64xf32>
    %123 = arith.addf %121, %122 : vector<16x64xf32>
    %124 = vector.extract_strided_slice %123 {offsets = [0, 0], sizes = [16, 32], strides = [1, 1]} : vector<16x64xf32> to vector<16x32xf32>
    %125 = vector.extract_strided_slice %123 {offsets = [0, 32], sizes = [16, 32], strides = [1, 1]} : vector<16x64xf32> to vector<16x32xf32>
    %126 = vector.shape_cast %120 : vector<16x32xf32> to vector<2x8x32xf32>
    %127 = vector.shape_cast %124 : vector<16x32xf32> to vector<2x8x32xf32>
    %128 = vector.shape_cast %125 : vector<16x32xf32> to vector<2x8x32xf32>
    %129 = vector.shape_cast %18 : vector<1x32xf32> to vector<1x1x32xf32>
    %130 = vector.broadcast %129 : vector<1x1x32xf32> to vector<2x8x32xf32>
    %131 = arith.mulf %126, %130 : vector<2x8x32xf32>
    %132 = vector.shape_cast %19 : vector<1x32xf32> to vector<1x1x32xf32>
    %133 = vector.broadcast %132 : vector<1x1x32xf32> to vector<2x8x32xf32>
    %134 = arith.mulf %126, %133 : vector<2x8x32xf32>
    %135 = vector.shape_cast %20 : vector<1x32xf32> to vector<1x1x32xf32>
    %136 = vector.broadcast %135 : vector<1x1x32xf32> to vector<2x8x32xf32>
    %137 = arith.mulf %126, %136 : vector<2x8x32xf32>
    %138 = vector.shape_cast %21 : vector<1x32xf32> to vector<1x1x32xf32>
    %139 = vector.broadcast %138 : vector<1x1x32xf32> to vector<2x8x32xf32>
    %140 = arith.mulf %126, %139 : vector<2x8x32xf32>
    %141 = tpu.concatenate %131, %134, %137, %140 in 1 : vector<2x8x32xf32>, vector<2x8x32xf32>, vector<2x8x32xf32>, vector<2x8x32xf32> -> vector<2x32x32xf32>
    "tpu.trace_start"() <{level = 10 : i32, message = "bqd,bkd->bqk"}> : () -> ()
    %cst_22 = arith.constant dense<0.000000e+00> : vector<2x32x8xf32>
    %142 = tpu.matmul %141, %127, %cst_22 {dimension_numbers = #tpu.dot_dimension_numbers<[2], [2], [1], [1], [0, 0, 0, 1, 1, 1], [0], [0]>} : vector<2x32x32xf32>, vector<2x8x32xf32>, vector<2x32x8xf32> -> vector<2x32x8xf32>
    "tpu.trace_stop"() : () -> ()
    %cst_23 = arith.constant dense<0xFF800000> : vector<2x32xf32>
    %143 = vector.multi_reduction <maximumf>, %142, %cst_23 [2] : vector<2x32x8xf32> to vector<2x32xf32>
    %144 = vector.shape_cast %143 : vector<2x32xf32> to vector<2x32x1xf32>
    %145 = vector.broadcast %144 : vector<2x32x1xf32> to vector<2x32x8xf32>
    %146 = arith.subf %142, %145 : vector<2x32x8xf32>
    %147 = math.exp %146 : vector<2x32x8xf32>
    %cst_24 = arith.constant dense<0.000000e+00> : vector<2x32xf32>
    %148 = vector.multi_reduction <add>, %147, %cst_24 [2] : vector<2x32x8xf32> to vector<2x32xf32>
    %149 = vector.shape_cast %148 : vector<2x32xf32> to vector<2x32x1xf32>
    %150 = vector.broadcast %149 : vector<2x32x1xf32> to vector<2x32x8xf32>
    %151 = arith.divf %147, %150 : vector<2x32x8xf32>
    "tpu.trace_start"() <{level = 10 : i32, message = "bqk,bkd->bqd"}> : () -> ()
    %cst_25 = arith.constant dense<0.000000e+00> : vector<2x32x32xf32>
    %152 = tpu.matmul %151, %128, %cst_25 {dimension_numbers = #tpu.dot_dimension_numbers<[2], [1], [1], [2], [0, 0, 0, 1, 1, 2], [0], [0]>} : vector<2x32x8xf32>, vector<2x8x32xf32>, vector<2x32x32xf32> -> vector<2x32x32xf32>
    "tpu.trace_stop"() : () -> ()
    %153 = vector.extract_strided_slice %152 {offsets = [0, 0, 0], sizes = [2, 8, 32], strides = [1, 1, 1]} : vector<2x32x32xf32> to vector<2x8x32xf32>
    %154 = vector.shape_cast %18 : vector<1x32xf32> to vector<1x1x32xf32>
    %155 = vector.broadcast %154 : vector<1x1x32xf32> to vector<2x8x32xf32>
    %156 = arith.mulf %153, %155 : vector<2x8x32xf32>
    %157 = vector.extract_strided_slice %152 {offsets = [0, 8, 0], sizes = [2, 8, 32], strides = [1, 1, 1]} : vector<2x32x32xf32> to vector<2x8x32xf32>
    %158 = vector.shape_cast %19 : vector<1x32xf32> to vector<1x1x32xf32>
    %159 = vector.broadcast %158 : vector<1x1x32xf32> to vector<2x8x32xf32>
    %160 = arith.mulf %157, %159 : vector<2x8x32xf32>
    %161 = arith.addf %156, %160 : vector<2x8x32xf32>
    %162 = vector.extract_strided_slice %152 {offsets = [0, 16, 0], sizes = [2, 8, 32], strides = [1, 1, 1]} : vector<2x32x32xf32> to vector<2x8x32xf32>
    %163 = vector.shape_cast %20 : vector<1x32xf32> to vector<1x1x32xf32>
    %164 = vector.broadcast %163 : vector<1x1x32xf32> to vector<2x8x32xf32>
    %165 = arith.mulf %162, %164 : vector<2x8x32xf32>
    %166 = arith.addf %161, %165 : vector<2x8x32xf32>
    %167 = vector.extract_strided_slice %152 {offsets = [0, 24, 0], sizes = [2, 8, 32], strides = [1, 1, 1]} : vector<2x32x32xf32> to vector<2x8x32xf32>
    %168 = vector.shape_cast %21 : vector<1x32xf32> to vector<1x1x32xf32>
    %169 = vector.broadcast %168 : vector<1x1x32xf32> to vector<2x8x32xf32>
    %170 = arith.mulf %167, %169 : vector<2x8x32xf32>
    %171 = arith.addf %166, %170 : vector<2x8x32xf32>
    %172 = vector.shape_cast %171 : vector<2x8x32xf32> to vector<16x32xf32>
    %cst_26 = arith.constant dense<0.000000e+00> : vector<16x32xf32>
    %173 = tpu.matmul %172, %26, %cst_26 {dimension_numbers = #tpu.dot_dimension_numbers<[1], [0], [0], [1], [0, 0, 1, 1], [], []>} : vector<16x32xf32>, vector<32x32xf32>, vector<16x32xf32> -> vector<16x32xf32>
    %174 = vector.broadcast %32 : vector<1x32xf32> to vector<16x32xf32>
    %175 = arith.addf %173, %174 : vector<16x32xf32>
    %176 = arith.addf %117, %175 : vector<16x32xf32>
    %cst_27 = arith.constant dense<0.000000e+00> : vector<16xf32>
    %177 = vector.multi_reduction <add>, %176, %cst_27 [1] : vector<16x32xf32> to vector<16xf32>
    %178 = vector.shape_cast %177 : vector<16xf32> to vector<16x1xf32>
    %cst_28 = arith.constant 3.200000e+01 : f32
    %179 = vector.broadcast %cst_28 : f32 to vector<16x1xf32>
    %180 = arith.divf %178, %179 : vector<16x1xf32>
    %181 = vector.broadcast %180 : vector<16x1xf32> to vector<16x32xf32>
    %182 = arith.subf %176, %181 : vector<16x32xf32>
    %183 = arith.mulf %182, %182 : vector<16x32xf32>
    %cst_29 = arith.constant dense<0.000000e+00> : vector<16xf32>
    %184 = vector.multi_reduction <add>, %183, %cst_29 [1] : vector<16x32xf32> to vector<16xf32>
    %185 = vector.shape_cast %184 : vector<16xf32> to vector<16x1xf32>
    %cst_30 = arith.constant 3.200000e+01 : f32
    %186 = vector.broadcast %cst_30 : f32 to vector<16x1xf32>
    %187 = arith.divf %185, %186 : vector<16x1xf32>
    %cst_31 = arith.constant 9.99999974E-6 : f32
    %188 = vector.broadcast %cst_31 : f32 to vector<16x1xf32>
    %189 = arith.addf %187, %188 : vector<16x1xf32>
    %190 = math.rsqrt %189 : vector<16x1xf32>
    %191 = vector.broadcast %190 : vector<16x1xf32> to vector<16x32xf32>
    %192 = arith.mulf %182, %191 : vector<16x32xf32>
    %193 = vector.broadcast %37 : vector<1x32xf32> to vector<16x32xf32>
    %194 = arith.mulf %192, %193 : vector<16x32xf32>
    %195 = vector.broadcast %38 : vector<1x32xf32> to vector<16x32xf32>
    %196 = arith.addf %194, %195 : vector<16x32xf32>
    %cst_32 = arith.constant dense<0.000000e+00> : vector<16x64xf32>
    %197 = tpu.matmul %196, %27, %cst_32 {dimension_numbers = #tpu.dot_dimension_numbers<[1], [0], [0], [1], [0, 0, 1, 1], [], []>} : vector<16x32xf32>, vector<32x64xf32>, vector<16x64xf32> -> vector<16x64xf32>
    %198 = vector.broadcast %33 : vector<1x64xf32> to vector<16x64xf32>
    %199 = arith.addf %197, %198 : vector<16x64xf32>
    %cst_33 = arith.constant 0.000000e+00 : f32
    %200 = vector.broadcast %cst_33 : f32 to vector<16x64xf32>
    %201 = arith.maximumf %199, %200 : vector<16x64xf32>
    %cst_34 = arith.constant dense<0.000000e+00> : vector<16x32xf32>
    %202 = tpu.matmul %201, %3, %cst_34 {dimension_numbers = #tpu.dot_dimension_numbers<[1], [0], [0], [1], [0, 0, 1, 1], [], []>} : vector<16x64xf32>, vector<64x32xf32>, vector<16x32xf32> -> vector<16x32xf32>
    %203 = vector.broadcast %34 : vector<1x32xf32> to vector<16x32xf32>
    %204 = arith.addf %202, %203 : vector<16x32xf32>
    %205 = arith.addf %196, %204 : vector<16x32xf32>
    %cst_35 = arith.constant dense<0.000000e+00> : vector<16xf32>
    %206 = vector.multi_reduction <add>, %205, %cst_35 [1] : vector<16x32xf32> to vector<16xf32>
    %207 = vector.shape_cast %206 : vector<16xf32> to vector<16x1xf32>
    %cst_36 = arith.constant 3.200000e+01 : f32
    %208 = vector.broadcast %cst_36 : f32 to vector<16x1xf32>
    %209 = arith.divf %207, %208 : vector<16x1xf32>
    %210 = vector.broadcast %209 : vector<16x1xf32> to vector<16x32xf32>
    %211 = arith.subf %205, %210 : vector<16x32xf32>
    %212 = arith.mulf %211, %211 : vector<16x32xf32>
    %cst_37 = arith.constant dense<0.000000e+00> : vector<16xf32>
    %213 = vector.multi_reduction <add>, %212, %cst_37 [1] : vector<16x32xf32> to vector<16xf32>
    %214 = vector.shape_cast %213 : vector<16xf32> to vector<16x1xf32>
    %cst_38 = arith.constant 3.200000e+01 : f32
    %215 = vector.broadcast %cst_38 : f32 to vector<16x1xf32>
    %216 = arith.divf %214, %215 : vector<16x1xf32>
    %cst_39 = arith.constant 9.99999974E-6 : f32
    %217 = vector.broadcast %cst_39 : f32 to vector<16x1xf32>
    %218 = arith.addf %216, %217 : vector<16x1xf32>
    %219 = math.rsqrt %218 : vector<16x1xf32>
    %220 = vector.broadcast %219 : vector<16x1xf32> to vector<16x32xf32>
    %221 = arith.mulf %211, %220 : vector<16x32xf32>
    %222 = vector.broadcast %39 : vector<1x32xf32> to vector<16x32xf32>
    %223 = arith.mulf %221, %222 : vector<16x32xf32>
    %224 = vector.broadcast %40 : vector<1x32xf32> to vector<16x32xf32>
    %225 = arith.addf %223, %224 : vector<16x32xf32>
    %c0_40 = arith.constant 0 : index
    %c0_41 = arith.constant 0 : index
    %226 = vector.load %arg5[%c0_40, %c0_41] : memref<16x32xf32, #tpu.memory_space<vmem>>, vector<16x32xf32>
    tpu.vector_store %arg5[%c0_40, %c0_41], %225 {strides = array<i32>} : memref<16x32xf32, #tpu.memory_space<vmem>>, vector<16x32xf32>,
    return
  }
}

</mosaic_0001>

<llo_original>
// kernel: decoder_layer.1
$region0: #{decoder_layer.1}
  #allocation0 [shape = 'u32[]', space=smem, size = 0x4, offset = 0x4, fixed_abs, tag = 'smem constant byte address 0x4 - core index']
  #allocation1 [shape = 'u32[72,128]{1,0:T(1,128)}', space=vmem, size = 0x9000, scoped, tag = 'internal scratch']
  %s0 = inlined_call_operand.hbm [shape: f32[16,32], index: 0, kind: input, shape index: {}]
  %s1 = inlined_call_operand.hbm [shape: f32[16,32], index: 1, kind: input, shape index: {}]
  %s2 = inlined_call_operand.vmem [shape: f32[32,384], index: 2, kind: input, shape index: {}]
  %s3 = inlined_call_operand.vmem [shape: f32[64,32], index: 3, kind: input, shape index: {}]
  %s4 = inlined_call_operand.hbm [shape: f32[16,128], index: 4, kind: input, shape index: {}]
  %s5 = inlined_call_operand.hbm [shape: f32[16,32], index: 5, kind: output, shape index: {}]
  %s6 = sld [smem:[#allocation0]]
  $region42: #{decoder_layer.1} parent=0
    _
  %s8 = ssub.s32 1, %s6
  %s9 = scalar_select 0, %s8, %s6
  $region1: #{decoder_layer.1} parent=0
    #allocation2 [shape = 'u8[8192]{0}', space=vmem, size = 0x2000, scoped, tag = 'input window, operand 0, single buffered']
    #allocation3 [shape = 's32[1]{0}', space=sflag, size = 0x4, scoped, tag = 'scoped memory for decoder_layer.1']
    #allocation4 [shape = 's32[1]{0}', space=sflag, size = 0x4, scoped, tag = 'scoped memory for decoder_layer.1']
    #allocation5 [shape = 'u8[8192]{0}', space=vmem, size = 0x2000, scoped, tag = 'input window, operand 1, single buffered']
    #allocation6 [shape = 's32[1]{0}', space=sflag, size = 0x4, scoped, tag = 'scoped memory for decoder_layer.1']
    #allocation7 [shape = 'u8[8192]{0}', space=vmem, size = 0x2000, scoped, tag = 'input window, operand 4, single buffered']
    #allocation8 [shape = 'u8[8192]{0}', space=vmem, size = 0x2000, scoped, tag = 'output window, operand 0, single buffered']
    %10 = vsyncpa [#allocation3], 0
    %11 = vsyncpa [#allocation6], 0
    %12 = vsyncpa [#allocation4], 0
    // Predicated region
    $region2: #{decoder_layer.1} parent=1 // pred_check
      _
    $region3: #{decoder_layer.1} parent=1 // pred_check_branch
      %14 = sbr.rel (0) target = $region5
    $region4: #{decoder_layer.1} parent=1 // pred_region
      %16 = vsyncadd [#allocation3], 0
      %s17 = sshll.u32 %s0, 4
      %s18 = int_to_ptr.hbm [resolvable:$true] %s17
      %s19 = sshll.u32 [#allocation2], 4
      %s20 = int_to_ptr.vmem [resolvable:$true] %s19
      %25 = dma.hbm_to_vmem [thread:$0]  %s18, 256, %s20, [#allocation3], 128, 128, 8
    $region5: #{decoder_layer.1} parent=1 // pred_fallthru
      _
    // Predicated region
    $region6: #{decoder_layer.1} parent=1 // pred_check
      _
    $region7: #{decoder_layer.1} parent=1 // pred_check_branch
      %27 = sbr.rel (0) target = $region9
    $region8: #{decoder_layer.1} parent=1 // pred_region
      %29 = vsyncadd [#allocation6], 0
      %s30 = sshll.u32 %s1, 4
      %s31 = int_to_ptr.hbm [resolvable:$true] %s30
      %s32 = sshll.u32 [#allocation5], 4
      %s33 = int_to_ptr.vmem [resolvable:$true] %s32
      %38 = dma.hbm_to_vmem [thread:$0]  %s31, 256, %s33, [#allocation6], 128, 128, 8
    $region9: #{decoder_layer.1} parent=1 // pred_fallthru
      _
    // Predicated region
    $region10: #{decoder_layer.1} parent=1 // pred_check
      _
    $region11: #{decoder_layer.1} parent=1 // pred_check_branch
      %40 = sbr.rel (0) target = $region13
    $region12: #{decoder_layer.1} parent=1 // pred_region
      _
    $region13: #{decoder_layer.1} parent=1 // pred_fallthru
      _
    // Predicated region
    $region14: #{decoder_layer.1} parent=1 // pred_check
      _
    $region15: #{decoder_layer.1} parent=1 // pred_check_branch
      %42 = sbr.rel (0) target = $region17
    $region16: #{decoder_layer.1} parent=1 // pred_region
      _
    $region17: #{decoder_layer.1} parent=1 // pred_fallthru
      _
    // Predicated region
    $region18: #{decoder_layer.1} parent=1 // pred_check
      _
    $region19: #{decoder_layer.1} parent=1 // pred_check_branch
      %44 = sbr.rel (0) target = $region21
    $region20: #{decoder_layer.1} parent=1 // pred_region
      %46 = vsyncadd [#allocation6], 0
      %s47 = sshll.u32 %s4, 4
      %s48 = int_to_ptr.hbm [resolvable:$true] %s47
      %s49 = sshll.u32 [#allocation7], 4
      %s50 = int_to_ptr.vmem [resolvable:$true] %s49
      %55 = dma.hbm_to_vmem [thread:$0]  %s48, 256, %s50, [#allocation6], 128, 128, 8
    $region21: #{decoder_layer.1} parent=1 // pred_fallthru
      _
    // Predicated region
    $region22: #{decoder_layer.1} parent=1 // pred_check
      _
    $region23: #{decoder_layer.1} parent=1 // pred_check_branch
      %57 = sbr.rel (0) target = $region25
    $region24: #{decoder_layer.1} parent=1 // pred_region
      %59 = dma.done [#allocation3], 256
    $region25: #{decoder_layer.1} parent=1 // pred_fallthru
      _
    // Predicated region
    $region26: #{decoder_layer.1} parent=1 // pred_check
      _
    $region27: #{decoder_layer.1} parent=1 // pred_check_branch
      %61 = sbr.rel (0) target = $region29
    $region28: #{decoder_layer.1} parent=1 // pred_region
      %63 = dma.done [#allocation6], 256
    $region29: #{decoder_layer.1} parent=1 // pred_fallthru
      _
    // Predicated region
    $region30: #{decoder_layer.1} parent=1 // pred_check
      _
    $region31: #{decoder_layer.1} parent=1 // pred_check_branch
      %65 = sbr.rel (0) target = $region33
    $region32: #{decoder_layer.1} parent=1 // pred_region
      %67 = dma.done [#allocation6], 256
    $region33: #{decoder_layer.1} parent=1 // pred_fallthru
      _
    %v68 = vld [vmem:[#allocation2] sm:$0xff]
    %v69 = vld [vmem:[#allocation2 + $0x8] sm:$0xff]
    %v70 = vld [vmem:[#allocation5] sm:$0xff]
    %v71 = vld [vmem:[#allocation5 + $0x8] sm:$0xff]
    %v72 = vld [vmem:[%s2] sm:$0xff]
    %v73 = vld [vmem:[%s2 + $0x8] sm:$0xff]
    %v74 = vld [vmem:[%s2 + $0x10] sm:$0xff]
    %v75 = vld [vmem:[%s2 + $0x18] sm:$0xff]
    %v76 = vld [vmem:[%s2 + $0x20] sm:$0xff]
    %v77 = vld [vmem:[%s2 + $0x28] sm:$0xff]
    %v78 = vld [vmem:[%s2 + $0x30] sm:$0xff]
    %v79 = vld [vmem:[%s2 + $0x38] sm:$0xff]
    %v80 = vld [vmem:[%s2 + $0x40] sm:$0xff]
    %v81 = vld [vmem:[%s2 + $0x48] sm:$0xff]
    %v82 = vld [vmem:[%s2 + $0x50] sm:$0xff]
    %v83 = vld [vmem:[%s2 + $0x58] sm:$0xff]
    %v84 = vld [vmem:[%s3] sm:$0xff]
    %v85 = vld [vmem:[%s3 + $0x8] sm:$0xff]
    %v86 = vld [vmem:[%s3 + $0x10] sm:$0xff]
    %v87 = vld [vmem:[%s3 + $0x18] sm:$0xff]
    %v88 = vld [vmem:[%s3 + $0x20] sm:$0xff]
    %v89 = vld [vmem:[%s3 + $0x28] sm:$0xff]
    %v90 = vld [vmem:[%s3 + $0x30] sm:$0xff]
    %v91 = vld [vmem:[%s3 + $0x38] sm:$0xff]
    %v92 = vld [vmem:[#allocation7] sm:$0xff]
    %v93 = vld [vmem:[#allocation7 + $0x8] sm:$0xff]
    %v94 = vlaneseq
    %v95 = vand.u32 %v94, 127
    %v96 = vlaneseq
    %v97 = vshrl.u32 %v96, 7
    %v98 = vmul.u32 %v97, 8
    %vm99 = vcmp.ge.s32.totalorder %v95, %v98
    %v100 = vadd.s32 %v97, 1
    %v101 = vmul.u32 %v100, 8
    %vm102 = vcmp.lt.s32.totalorder %v95, %v101
    %vm103 = vmand %vm99, %vm102
    %v104 = vsel %vm103, 1, 0
    %v105 = vcvt.s32.f32 %v104
    %v106 = vperm.slane %v92, 0
    %vm107 = vcmask 261120
    %v109 = vsel %vm107, %v68, 0
    %v112 = vsel %vm107, %v69, 0
    %114 = vmatpush.msra.mxu0 0.0
    %115 = vmatpush.msra.mxu0 0.0
    %116 = vmatpush.msra.mxu0 0.0
    %117 = vmatpush.msra.mxu0 0.0
    %118 = vmatpush.msra.mxu0 0.0
    %119 = vmatpush.msra.mxu0 0.0
    %120 = vmatpush.msra.mxu0 0.0
    %121 = vmatpush.msra.mxu0 0.0
    %122 = vmatpush.msra.mxu0 0.0
    %123 = vmatpush.msra.mxu0 0.0
    %124 = vmatpush.msra.mxu0 0.0
    %125 = vmatpush.msra.mxu0 0.0
    %126 = vmatpush.msra.mxu0 %v81
    %127 = vmatpush.msra.mxu0 %v78
    %128 = vmatpush.msra.mxu0 %v75
    %129 = vmatpush.msra.mxu0 %v72
    %130 = vmatmul.f32.gmra.mxu0 %v109
    %v131 = vpop.f32.mrf.mxu0
    %v132 = vadd.f32 %v106, %v131
    %133 = vmatmul.f32.gmra.mxu0 %v112
    %v134 = vpop.f32.mrf.mxu0
    %v135 = vadd.f32 %v106, %v134
    %136 = vdwg.mxu0
    %v137 = vperm.slane %v105, 0
    %v138 = vmul.f32 %v132, %v137
    %v139 = vmul.f32 %v135, %v137
    %v140 = vperm.slane %v105, 1
    %v141 = vmul.f32 %v132, %v140
    %v142 = vmul.f32 %v135, %v140
    %v143 = vperm.slane %v105, 2
    %v144 = vmul.f32 %v132, %v143
    %v145 = vmul.f32 %v135, %v143
    %v146 = vperm.slane %v105, 3
    %v147 = vmul.f32 %v132, %v146
    %v148 = vmul.f32 %v135, %v146
    %150 = vrot.lane.b32.xlu0 %v132, 96
    %v151 = vpop.permute.xlu0 %150
    %v153 = vsel %vm107, %v138, 0
    %v156 = vsel %vm107, %v141, 0
    %v159 = vsel %vm107, %v144, 0
    %v162 = vsel %vm107, %v147, 0
    %v164 = vsel %vm107, %v151, 0
    %166 = vmatpush.xpose.msra.mxu0 0.0
    %167 = vmatpush.xpose.msra.mxu0 0.0
    %168 = vmatpush.xpose.msra.mxu0 0.0
    %169 = vmatpush.xpose.msra.mxu0 0.0
    %170 = vmatpush.xpose.msra.mxu0 0.0
    %171 = vmatpush.xpose.msra.mxu0 0.0
    %172 = vmatpush.xpose.msra.mxu0 0.0
    %173 = vmatpush.xpose.msra.mxu0 0.0
    %174 = vmatpush.xpose.msra.mxu0 0.0
    %175 = vmatpush.xpose.msra.mxu0 0.0
    %176 = vmatpush.xpose.msra.mxu0 0.0
    %177 = vmatpush.xpose.msra.mxu0 0.0
    %178 = vmatpush.xpose.msra.mxu0 0.0
    %179 = vmatpush.xpose.msra.mxu0 0.0
    %180 = vmatpush.xpose.msra.mxu0 0.0
    %181 = vmatpush.xpose.msra.mxu0 %v164
    %182 = vmatmul.f32.gmra.mxu0 %v153
    %v183 = vpop.f32.mrf.mxu0
    %v184 = vadd.f32 0.0, %v183
    %185 = vmatmul.f32.gmra.mxu0 %v156
    %v186 = vpop.f32.mrf.mxu0
    %v187 = vadd.f32 0.0, %v186
    %188 = vmatmul.f32.gmra.mxu0 %v159
    %v189 = vpop.f32.mrf.mxu0
    %v190 = vadd.f32 0.0, %v189
    %191 = vmatmul.f32.gmra.mxu0 %v162
    %v192 = vpop.f32.mrf.mxu0
    %v193 = vadd.f32 0.0, %v192
    %194 = vdwg.mxu0
    %196 = vrot.lane.b32.xlu0 %v135, 96
    %v197 = vpop.permute.xlu0 %196
    %v199 = vsel %vm107, %v139, 0
    %v202 = vsel %vm107, %v142, 0
    %v205 = vsel %vm107, %v145, 0
    %v208 = vsel %vm107, %v148, 0
    %v210 = vsel %vm107, %v197, 0
    %212 = vmatpush.xpose.msra.mxu0 0.0
    %213 = vmatpush.xpose.msra.mxu0 0.0
    %214 = vmatpush.xpose.msra.mxu0 0.0
    %215 = vmatpush.xpose.msra.mxu0 0.0
    %216 = vmatpush.xpose.msra.mxu0 0.0
    %217 = vmatpush.xpose.msra.mxu0 0.0
    %218 = vmatpush.xpose.msra.mxu0 0.0
    %219 = vmatpush.xpose.msra.mxu0 0.0
    %220 = vmatpush.xpose.msra.mxu0 0.0
    %221 = vmatpush.xpose.msra.mxu0 0.0
    %222 = vmatpush.xpose.msra.mxu0 0.0
    %223 = vmatpush.xpose.msra.mxu0 0.0
    %224 = vmatpush.xpose.msra.mxu0 0.0
    %225 = vmatpush.xpose.msra.mxu0 0.0
    %226 = vmatpush.xpose.msra.mxu0 0.0
    %227 = vmatpush.xpose.msra.mxu0 %v210
    %228 = vmatmul.f32.gmra.mxu0 %v199
    %v229 = vpop.f32.mrf.mxu0
    %v230 = vadd.f32 0.0, %v229
    %231 = vmatmul.f32.gmra.mxu0 %v202
    %v232 = vpop.f32.mrf.mxu0
    %v233 = vadd.f32 0.0, %v232
    %234 = vmatmul.f32.gmra.mxu0 %v205
    %v235 = vpop.f32.mrf.mxu0
    %v236 = vadd.f32 0.0, %v235
    %237 = vmatmul.f32.gmra.mxu0 %v208
    %v238 = vpop.f32.mrf.mxu0
    %v239 = vadd.f32 0.0, %v238
    %240 = vdwg.mxu0
    %vm241 = vcmask 64512
    %v242 = vsel %vm241, %v184, -inf
    %243 = vmax.xlane.f32.xlu0 %v242
    %v244 = vpop.xlane.xlu0 %243
    %v245 = vsel %vm241, %v187, -inf
    %246 = vmax.xlane.f32.xlu0 %v245
    %v247 = vpop.xlane.xlu0 %246
    %v248 = vsel %vm241, %v190, -inf
    %249 = vmax.xlane.f32.xlu0 %v248
    %v250 = vpop.xlane.xlu0 %249
    %v251 = vsel %vm241, %v193, -inf
    %252 = vmax.xlane.f32.xlu0 %v251
    %v253 = vpop.xlane.xlu0 %252
    %v254 = vsel %vm241, %v230, -inf
    %255 = vmax.xlane.f32.xlu0 %v254
    %v256 = vpop.xlane.xlu0 %255
    %v257 = vsel %vm241, %v233, -inf
    %258 = vmax.xlane.f32.xlu0 %v257
    %v259 = vpop.xlane.xlu0 %258
    %v260 = vsel %vm241, %v236, -inf
    %261 = vmax.xlane.f32.xlu0 %v260
    %v262 = vpop.xlane.xlu0 %261
    %v263 = vsel %vm241, %v239, -inf
    %264 = vmax.xlane.f32.xlu0 %v263
    %v265 = vpop.xlane.xlu0 %264
    %v266 = vsub.f32 %v184, %v244
    %v267 = vsub.f32 %v187, %v247
    %v268 = vsub.f32 %v190, %v250
    %v269 = vsub.f32 %v193, %v253
    %v270 = vsub.f32 %v230, %v256
    %v271 = vsub.f32 %v233, %v259
    %v272 = vsub.f32 %v236, %v262
    %v273 = vsub.f32 %v239, %v265
    %v274 = vmul.f32 %v266, 1.442695
    %v275 = vpow.pop %v274
    %v276 = vmul.f32 %v267, 1.442695
    %v277 = vpow.pop %v276
    %v278 = vmul.f32 %v268, 1.442695
    %v279 = vpow.pop %v278
    %v280 = vmul.f32 %v269, 1.442695
    %v281 = vpow.pop %v280
    %v282 = vmul.f32 %v270, 1.442695
    %v283 = vpow.pop %v282
    %v284 = vmul.f32 %v271, 1.442695
    %v285 = vpow.pop %v284
    %v286 = vmul.f32 %v272, 1.442695
    %v287 = vpow.pop %v286
    %v288 = vmul.f32 %v273, 1.442695
    %v289 = vpow.pop %v288
    %v290 = vsel %vm241, %v275, 0.0
    %291 = vadd.xlane.f32.xlu0 %v290
    %v292 = vpop.xlane.xlu0 %291
    %v293 = vsel %vm241, %v277, 0.0
    %294 = vadd.xlane.f32.xlu0 %v293
    %v295 = vpop.xlane.xlu0 %294
    %v296 = vsel %vm241, %v279, 0.0
    %297 = vadd.xlane.f32.xlu0 %v296
    %v298 = vpop.xlane.xlu0 %297
    %v299 = vsel %vm241, %v281, 0.0
    %300 = vadd.xlane.f32.xlu0 %v299
    %v301 = vpop.xlane.xlu0 %300
    %v302 = vsel %vm241, %v283, 0.0
    %303 = vadd.xlane.f32.xlu0 %v302
    %v304 = vpop.xlane.xlu0 %303
    %v305 = vsel %vm241, %v285, 0.0
    %306 = vadd.xlane.f32.xlu0 %v305
    %v307 = vpop.xlane.xlu0 %306
    %v308 = vsel %vm241, %v287, 0.0
    %309 = vadd.xlane.f32.xlu0 %v308
    %v310 = vpop.xlane.xlu0 %309
    %v311 = vsel %vm241, %v289, 0.0
    %312 = vadd.xlane.f32.xlu0 %v311
    %v313 = vpop.xlane.xlu0 %312
    %v314 = vrcp.pop %v292
    %v315 = vmul.f32 %v292, %v314
    %v316 = vsub.f32 1.0, %v315
    %v317 = vmul.f32 %v314, %v316
    %v318 = vadd.f32 %v314, %v317
    %vm319 = vweird.f32 %v292
    %vm320 = vweird.f32 %v314
    %vm321 = vmor %vm319, %vm320
    %v322 = vsel %vm321, %v314, %v318
    %v323 = vand.u32 2147483647, %v292
    %vm324 = vcmp.eq.f32.partialorder %v323, 8.507059e+37
    %v325 = vand.u32 %v292, 2147483648
    %v326 = vor.u32 1.1754944e-38, %v325
    %v327 = vsel %vm324, %v326, %v322
    %v328 = vmul.f32 %v275, %v327
    %v329 = vrcp.pop %v295
    %v330 = vmul.f32 %v295, %v329
    %v331 = vsub.f32 1.0, %v330
    %v332 = vmul.f32 %v329, %v331
    %v333 = vadd.f32 %v329, %v332
    %vm334 = vweird.f32 %v295
    %vm335 = vweird.f32 %v329
    %vm336 = vmor %vm334, %vm335
    %v337 = vsel %vm336, %v329, %v333
    %v338 = vand.u32 2147483647, %v295
    %vm339 = vcmp.eq.f32.partialorder %v338, 8.507059e+37
    %v340 = vand.u32 %v295, 2147483648
    %v341 = vor.u32 1.1754944e-38, %v340
    %v342 = vsel %vm339, %v341, %v337
    %v343 = vmul.f32 %v277, %v342
    %v344 = vrcp.pop %v298
    %v345 = vmul.f32 %v298, %v344
    %v346 = vsub.f32 1.0, %v345
    %v347 = vmul.f32 %v344, %v346
    %v348 = vadd.f32 %v344, %v347
    %vm349 = vweird.f32 %v298
    %vm350 = vweird.f32 %v344
    %vm351 = vmor %vm349, %vm350
    %v352 = vsel %vm351, %v344, %v348
    %v353 = vand.u32 2147483647, %v298
    %vm354 = vcmp.eq.f32.partialorder %v353, 8.507059e+37
    %v355 = vand.u32 %v298, 2147483648
    %v356 = vor.u32 1.1754944e-38, %v355
    %v357 = vsel %vm354, %v356, %v352
    %v358 = vmul.f32 %v279, %v357
    %v359 = vrcp.pop %v301
    %v360 = vmul.f32 %v301, %v359
    %v361 = vsub.f32 1.0, %v360
    %v362 = vmul.f32 %v359, %v361
    %v363 = vadd.f32 %v359, %v362
    %vm364 = vweird.f32 %v301
    %vm365 = vweird.f32 %v359
    %vm366 = vmor %vm364, %vm365
    %v367 = vsel %vm366, %v359, %v363
    %v368 = vand.u32 2147483647, %v301
    %vm369 = vcmp.eq.f32.partialorder %v368, 8.507059e+37
    %v370 = vand.u32 %v301, 2147483648
    %v371 = vor.u32 1.1754944e-38, %v370
    %v372 = vsel %vm369, %v371, %v367
    %v373 = vmul.f32 %v281, %v372
    %v374 = vrcp.pop %v304
    %v375 = vmul.f32 %v304, %v374
    %v376 = vsub.f32 1.0, %v375
    %v377 = vmul.f32 %v374, %v376
    %v378 = vadd.f32 %v374, %v377
    %vm379 = vweird.f32 %v304
    %vm380 = vweird.f32 %v374
    %vm381 = vmor %vm379, %vm380
    %v382 = vsel %vm381, %v374, %v378
    %v383 = vand.u32 2147483647, %v304
    %vm384 = vcmp.eq.f32.partialorder %v383, 8.507059e+37
    %v385 = vand.u32 %v304, 2147483648
    %v386 = vor.u32 1.1754944e-38, %v385
    %v387 = vsel %vm384, %v386, %v382
    %v388 = vmul.f32 %v283, %v387
    %v389 = vrcp.pop %v307
    %v390 = vmul.f32 %v307, %v389
    %v391 = vsub.f32 1.0, %v390
    %v392 = vmul.f32 %v389, %v391
    %v393 = vadd.f32 %v389, %v392
    %vm394 = vweird.f32 %v307
    %vm395 = vweird.f32 %v389
    %vm396 = vmor %vm394, %vm395
    %v397 = vsel %vm396, %v389, %v393
    %v398 = vand.u32 2147483647, %v307
    %vm399 = vcmp.eq.f32.partialorder %v398, 8.507059e+37
    %v400 = vand.u32 %v307, 2147483648
    %v401 = vor.u32 1.1754944e-38, %v400
    %v402 = vsel %vm399, %v401, %v397
    %v403 = vmul.f32 %v285, %v402
    %v404 = vrcp.pop %v310
    %v405 = vmul.f32 %v310, %v404
    %v406 = vsub.f32 1.0, %v405
    %v407 = vmul.f32 %v404, %v406
    %v408 = vadd.f32 %v404, %v407
    %vm409 = vweird.f32 %v310
    %vm410 = vweird.f32 %v404
    %vm411 = vmor %vm409, %vm410
    %v412 = vsel %vm411, %v404, %v408
    %v413 = vand.u32 2147483647, %v310
    %vm414 = vcmp.eq.f32.partialorder %v413, 8.507059e+37
    %v415 = vand.u32 %v310, 2147483648
    %v416 = vor.u32 1.1754944e-38, %v415
    %v417 = vsel %vm414, %v416, %v412
    %v418 = vmul.f32 %v287, %v417
    %v419 = vrcp.pop %v313
    %v420 = vmul.f32 %v313, %v419
    %v421 = vsub.f32 1.0, %v420
    %v422 = vmul.f32 %v419, %v421
    %v423 = vadd.f32 %v419, %v422
    %vm424 = vweird.f32 %v313
    %vm425 = vweird.f32 %v419
    %vm426 = vmor %vm424, %vm425
    %v427 = vsel %vm426, %v419, %v423
    %v428 = vand.u32 2147483647, %v313
    %vm429 = vcmp.eq.f32.partialorder %v428, 8.507059e+37
    %v430 = vand.u32 %v313, 2147483648
    %v431 = vor.u32 1.1754944e-38, %v430
    %v432 = vsel %vm429, %v431, %v427
    %v433 = vmul.f32 %v289, %v432
    %434 = vrot.lane.b32.xlu0 %v132, 64
    %v435 = vpop.permute.xlu0 %434
    %v438 = vsel %vm241, %v328, 0
    %v441 = vsel %vm241, %v343, 0
    %v444 = vsel %vm241, %v358, 0
    %v447 = vsel %vm241, %v373, 0
    %449 = vmatpush.msra.mxu0 0.0
    %450 = vmatpush.msra.mxu0 0.0
    %451 = vmatpush.msra.mxu0 0.0
    %452 = vmatpush.msra.mxu0 0.0
    %453 = vmatpush.msra.mxu0 0.0
    %454 = vmatpush.msra.mxu0 0.0
    %455 = vmatpush.msra.mxu0 0.0
    %456 = vmatpush.msra.mxu0 0.0
    %457 = vmatpush.msra.mxu0 0.0
    %458 = vmatpush.msra.mxu0 0.0
    %459 = vmatpush.msra.mxu0 0.0
    %460 = vmatpush.msra.mxu0 0.0
    %461 = vmatpush.msra.mxu0 0.0
    %462 = vmatpush.msra.mxu0 0.0
    %463 = vmatpush.msra.mxu0 0.0
    %464 = vmatpush.msra.mxu0 %v435
    %465 = vmatmul.f32.gmra.mxu0 %v438
    %v466 = vpop.f32.mrf.mxu0
    %v467 = vadd.f32 0.0, %v466
    %468 = vmatmul.f32.gmra.mxu0 %v441
    %v469 = vpop.f32.mrf.mxu0
    %v470 = vadd.f32 0.0, %v469
    %471 = vmatmul.f32.gmra.mxu0 %v444
    %v472 = vpop.f32.mrf.mxu0
    %v473 = vadd.f32 0.0, %v472
    %474 = vmatmul.f32.gmra.mxu0 %v447
    %v475 = vpop.f32.mrf.mxu0
    %v476 = vadd.f32 0.0, %v475
    %477 = vdwg.mxu0
    %478 = vrot.lane.b32.xlu0 %v135, 64
    %v479 = vpop.permute.xlu0 %478
    %v482 = vsel %vm241, %v388, 0
    %v485 = vsel %vm241, %v403, 0
    %v488 = vsel %vm241, %v418, 0
    %v491 = vsel %vm241, %v433, 0
    %493 = vmatpush.msra.mxu0 0.0
    %494 = vmatpush.msra.mxu0 0.0
    %495 = vmatpush.msra.mxu0 0.0
    %496 = vmatpush.msra.mxu0 0.0
    %497 = vmatpush.msra.mxu0 0.0
    %498 = vmatpush.msra.mxu0 0.0
    %499 = vmatpush.msra.mxu0 0.0
    %500 = vmatpush.msra.mxu0 0.0
    %501 = vmatpush.msra.mxu0 0.0
    %502 = vmatpush.msra.mxu0 0.0
    %503 = vmatpush.msra.mxu0 0.0
    %504 = vmatpush.msra.mxu0 0.0
    %505 = vmatpush.msra.mxu0 0.0
    %506 = vmatpush.msra.mxu0 0.0
    %507 = vmatpush.msra.mxu0 0.0
    %508 = vmatpush.msra.mxu0 %v479
    %509 = vmatmul.f32.gmra.mxu0 %v482
    %v510 = vpop.f32.mrf.mxu0
    %v511 = vadd.f32 0.0, %v510
    %512 = vmatmul.f32.gmra.mxu0 %v485
    %v513 = vpop.f32.mrf.mxu0
    %v514 = vadd.f32 0.0, %v513
    %515 = vmatmul.f32.gmra.mxu0 %v488
    %v516 = vpop.f32.mrf.mxu0
    %v517 = vadd.f32 0.0, %v516
    %518 = vmatmul.f32.gmra.mxu0 %v491
    %v519 = vpop.f32.mrf.mxu0
    %v520 = vadd.f32 0.0, %v519
    %521 = vdwg.mxu0
    %v522 = vmul.f32 %v467, %v137
    %v523 = vmul.f32 %v511, %v137
    %v524 = vmul.f32 %v470, %v140
    %v525 = vmul.f32 %v514, %v140
    %v526 = vadd.f32 %v522, %v524
    %v527 = vadd.f32 %v523, %v525
    %v528 = vmul.f32 %v473, %v143
    %v529 = vmul.f32 %v517, %v143
    %v530 = vadd.f32 %v526, %v528
    %v531 = vadd.f32 %v527, %v529
    %v532 = vmul.f32 %v476, %v146
    %v533 = vmul.f32 %v520, %v146
    %v534 = vadd.f32 %v530, %v532
    %v535 = vadd.f32 %v531, %v533
    %v536 = vperm.slane %v92, 1
    %v538 = vsel %vm107, %v534, 0
    %v541 = vsel %vm107, %v535, 0
    %543 = vmatpush.msra.mxu0 0.0
    %544 = vmatpush.msra.mxu0 0.0
    %545 = vmatpush.msra.mxu0 0.0
    %546 = vmatpush.msra.mxu0 0.0
    %547 = vmatpush.msra.mxu0 0.0
    %548 = vmatpush.msra.mxu0 0.0
    %549 = vmatpush.msra.mxu0 0.0
    %550 = vmatpush.msra.mxu0 0.0
    %551 = vmatpush.msra.mxu0 0.0
    %552 = vmatpush.msra.mxu0 0.0
    %553 = vmatpush.msra.mxu0 0.0
    %554 = vmatpush.msra.mxu0 0.0
    %555 = vmatpush.msra.mxu0 %v82
    %556 = vmatpush.msra.mxu0 %v79
    %557 = vmatpush.msra.mxu0 %v76
    %558 = vmatpush.msra.mxu0 %v73
    %559 = vmatmul.f32.gmra.mxu0 %v538
    %v560 = vpop.f32.mrf.mxu0
    %v561 = vadd.f32 %v536, %v560
    %562 = vmatmul.f32.gmra.mxu0 %v541
    %v563 = vpop.f32.mrf.mxu0
    %v564 = vadd.f32 %v536, %v563
    %565 = vdwg.mxu0
    %v566 = vadd.f32 %v68, %v561
    %v567 = vadd.f32 %v69, %v564
    %v568 = vsel %vm107, %v566, 0.0
    %569 = vadd.xlane.f32.xlu0 %v568
    %v570 = vpop.xlane.xlu0 %569
    %v571 = vsel %vm107, %v567, 0.0
    %572 = vadd.xlane.f32.xlu0 %v571
    %v573 = vpop.xlane.xlu0 %572
    %v574 = vrcp.pop 32.0
    %v575 = vmul.f32 32.0, %v574
    %v576 = vsub.f32 1.0, %v575
    %v577 = vmul.f32 %v574, %v576
    %v578 = vadd.f32 %v574, %v577
    %vm579 = vweird.f32 %v574
    %v580 = vsel %vm579, %v574, %v578
    %v581 = vmul.f32 %v570, %v580
    %v582 = vmul.f32 %v573, %v580
    %v583 = vsub.f32 %v566, %v581
    %v584 = vsub.f32 %v567, %v582
    %v585 = vmul.f32 %v583, %v583
    %v586 = vmul.f32 %v584, %v584
    %v587 = vsel %vm107, %v585, 0.0
    %588 = vadd.xlane.f32.xlu0 %v587
    %v589 = vpop.xlane.xlu0 %588
    %v590 = vsel %vm107, %v586, 0.0
    %591 = vadd.xlane.f32.xlu0 %v590
    %v592 = vpop.xlane.xlu0 %591
    %v593 = vmul.f32 %v589, %v580
    %v594 = vmul.f32 %v592, %v580
    %v595 = vadd.f32 %v593, 1e-05
    %v596 = vadd.f32 %v594, 1e-05
    %v597 = vrsqrt.pop %v595
    %v598 = vmul.f32 %v597, %v595
    %v599 = vmul.f32 %v598, %v597
    %v600 = vmul.f32 0.5, %v599
    %v601 = vsub.f32 1.5, %v600
    %v602 = vmul.f32 %v597, %v601
    %vm603 = vweird.f32 %v595
    %vm604 = vweird.f32 %v597
    %vm605 = vmor %vm603, %vm604
    %v606 = vsel %vm605, %v597, %v602
    %v607 = vrsqrt.pop %v596
    %v608 = vmul.f32 %v607, %v596
    %v609 = vmul.f32 %v608, %v607
    %v610 = vmul.f32 0.5, %v609
    %v611 = vsub.f32 1.5, %v610
    %v612 = vmul.f32 %v607, %v611
    %vm613 = vweird.f32 %v596
    %vm614 = vweird.f32 %v607
    %vm615 = vmor %vm613, %vm614
    %v616 = vsel %vm615, %v607, %v612
    %v617 = vmul.f32 %v583, %v606
    %v618 = vmul.f32 %v584, %v616
    %v619 = vperm.slane %v92, 7
    %v620 = vmul.f32 %v617, %v619
    %v621 = vmul.f32 %v618, %v619
    %v622 = vperm.slane %v93, 0
    %v623 = vadd.f32 %v620, %v622
    %v624 = vadd.f32 %v621, %v622
    %v625 = vperm.slane %v92, 2
    %630 = vrot.lane.b32.xlu0 %v73, 96
    %v631 = vpop.permute.xlu0 %630
    %632 = vrot.lane.b32.xlu0 %v76, 96
    %v633 = vpop.permute.xlu0 %632
    %634 = vrot.lane.b32.xlu0 %v79, 96
    %v635 = vpop.permute.xlu0 %634
    %636 = vrot.lane.b32.xlu0 %v82, 96
    %v637 = vpop.permute.xlu0 %636
    %v643 = vsel %vm107, %v623, 0
    %v646 = vsel %vm107, %v624, 0
    %648 = vmatpush.msra.mxu0 0.0
    %649 = vmatpush.msra.mxu0 0.0
    %650 = vmatpush.msra.mxu0 0.0
    %651 = vmatpush.msra.mxu0 0.0
    %652 = vmatpush.msra.mxu0 0.0
    %653 = vmatpush.msra.mxu0 0.0
    %654 = vmatpush.msra.mxu0 0.0
    %655 = vmatpush.msra.mxu0 0.0
    %656 = vmatpush.msra.mxu0 0.0
    %657 = vmatpush.msra.mxu0 0.0
    %658 = vmatpush.msra.mxu0 0.0
    %659 = vmatpush.msra.mxu0 0.0
    %660 = vmatpush.msra.mxu0 %v637
    %661 = vmatpush.msra.mxu0 %v635
    %662 = vmatpush.msra.mxu0 %v633
    %663 = vmatpush.msra.mxu0 %v631
    %664 = vmatmul.f32.gmra.mxu0 %v643
    %v665 = vpop.f32.mrf.mxu0
    %v666 = vadd.f32 %v625, %v665
    %667 = vmatmul.f32.gmra.mxu0 %v646
    %v668 = vpop.f32.mrf.mxu0
    %v669 = vadd.f32 %v625, %v668
    %670 = vdwg.mxu0
    %v671 = vperm.slane %v92, 3
    %672 = vrot.lane.b32.xlu0 %v73, 64
    %v673 = vpop.permute.xlu0 %672
    %674 = vrot.lane.b32.xlu0 %v76, 64
    %v675 = vpop.permute.xlu0 %674
    %676 = vrot.lane.b32.xlu0 %v79, 64
    %v677 = vpop.permute.xlu0 %676
    %678 = vrot.lane.b32.xlu0 %v82, 64
    %v679 = vpop.permute.xlu0 %678
    %v685 = vsel %vm107, %v70, 0
    %v688 = vsel %vm107, %v71, 0
    %690 = vmatpush.msra.mxu0 0.0
    %691 = vmatpush.msra.mxu0 0.0
    %692 = vmatpush.msra.mxu0 0.0
    %693 = vmatpush.msra.mxu0 0.0
    %694 = vmatpush.msra.mxu0 0.0
    %695 = vmatpush.msra.mxu0 0.0
    %696 = vmatpush.msra.mxu0 0.0
    %697 = vmatpush.msra.mxu0 0.0
    %698 = vmatpush.msra.mxu0 0.0
    %699 = vmatpush.msra.mxu0 0.0
    %700 = vmatpush.msra.mxu0 0.0
    %701 = vmatpush.msra.mxu0 0.0
    %702 = vmatpush.msra.mxu0 %v679
    %703 = vmatpush.msra.mxu0 %v677
    %704 = vmatpush.msra.mxu0 %v675
    %705 = vmatpush.msra.mxu0 %v673
    %706 = vmatmul.f32.gmra.mxu0 %v685
    %v707 = vpop.f32.mrf.mxu0
    %v708 = vadd.f32 %v671, %v707
    %709 = vmatmul.f32.gmra.mxu0 %v688
    %v710 = vpop.f32.mrf.mxu0
    %v711 = vadd.f32 %v671, %v710
    %712 = vdwg.mxu0
    %v713 = vmul.f32 %v666, %v137
    %v714 = vmul.f32 %v669, %v137
    %v715 = vmul.f32 %v666, %v140
    %v716 = vmul.f32 %v669, %v140
    %v717 = vmul.f32 %v666, %v143
    %v718 = vmul.f32 %v669, %v143
    %v719 = vmul.f32 %v666, %v146
    %v720 = vmul.f32 %v669, %v146
    %v722 = vsel %vm107, %v713, 0
    %v725 = vsel %vm107, %v715, 0
    %v728 = vsel %vm107, %v717, 0
    %v731 = vsel %vm107, %v719, 0
    %v734 = vsel %vm107, %v708, 0
    %736 = vmatpush.xpose.msra.mxu0 0.0
    %737 = vmatpush.xpose.msra.mxu0 0.0
    %738 = vmatpush.xpose.msra.mxu0 0.0
    %739 = vmatpush.xpose.msra.mxu0 0.0
    %740 = vmatpush.xpose.msra.mxu0 0.0
    %741 = vmatpush.xpose.msra.mxu0 0.0
    %742 = vmatpush.xpose.msra.mxu0 0.0
    %743 = vmatpush.xpose.msra.mxu0 0.0
    %744 = vmatpush.xpose.msra.mxu0 0.0
    %745 = vmatpush.xpose.msra.mxu0 0.0
    %746 = vmatpush.xpose.msra.mxu0 0.0
    %747 = vmatpush.xpose.msra.mxu0 0.0
    %748 = vmatpush.xpose.msra.mxu0 0.0
    %749 = vmatpush.xpose.msra.mxu0 0.0
    %750 = vmatpush.xpose.msra.mxu0 0.0
    %751 = vmatpush.xpose.msra.mxu0 %v734
    %752 = vmatmul.f32.gmra.mxu0 %v722
    %v753 = vpop.f32.mrf.mxu0
    %v754 = vadd.f32 0.0, %v753
    %755 = vmatmul.f32.gmra.mxu0 %v725
    %v756 = vpop.f32.mrf.mxu0
    %v757 = vadd.f32 0.0, %v756
    %758 = vmatmul.f32.gmra.mxu0 %v728
    %v759 = vpop.f32.mrf.mxu0
    %v760 = vadd.f32 0.0, %v759
    %761 = vmatmul.f32.gmra.mxu0 %v731
    %v762 = vpop.f32.mrf.mxu0
    %v763 = vadd.f32 0.0, %v762
    %764 = vdwg.mxu0
    %v766 = vsel %vm107, %v714, 0
    %v769 = vsel %vm107, %v716, 0
    %v772 = vsel %vm107, %v718, 0
    %v775 = vsel %vm107, %v720, 0
    %v778 = vsel %vm107, %v711, 0
    %780 = vmatpush.xpose.msra.mxu0 0.0
    %781 = vmatpush.xpose.msra.mxu0 0.0
    %782 = vmatpush.xpose.msra.mxu0 0.0
    %783 = vmatpush.xpose.msra.mxu0 0.0
    %784 = vmatpush.xpose.msra.mxu0 0.0
    %785 = vmatpush.xpose.msra.mxu0 0.0
    %786 = vmatpush.xpose.msra.mxu0 0.0
    %787 = vmatpush.xpose.msra.mxu0 0.0
    %788 = vmatpush.xpose.msra.mxu0 0.0
    %789 = vmatpush.xpose.msra.mxu0 0.0
    %790 = vmatpush.xpose.msra.mxu0 0.0
    %791 = vmatpush.xpose.msra.mxu0 0.0
    %792 = vmatpush.xpose.msra.mxu0 0.0
    %793 = vmatpush.xpose.msra.mxu0 0.0
    %794 = vmatpush.xpose.msra.mxu0 0.0
    %795 = vmatpush.xpose.msra.mxu0 %v778
    %796 = vmatmul.f32.gmra.mxu0 %v766
    %v797 = vpop.f32.mrf.mxu0
    %v798 = vadd.f32 0.0, %v797
    %799 = vmatmul.f32.gmra.mxu0 %v769
    %v800 = vpop.f32.mrf.mxu0
    %v801 = vadd.f32 0.0, %v800
    %802 = vmatmul.f32.gmra.mxu0 %v772
    %v803 = vpop.f32.mrf.mxu0
    %v804 = vadd.f32 0.0, %v803
    %805 = vmatmul.f32.gmra.mxu0 %v775
    %v806 = vpop.f32.mrf.mxu0
    %v807 = vadd.f32 0.0, %v806
    %808 = vdwg.mxu0
    %v809 = vsel %vm241, %v754, -inf
    %810 = vmax.xlane.f32.xlu0 %v809
    %v811 = vpop.xlane.xlu0 %810
    %v812 = vsel %vm241, %v757, -inf
    %813 = vmax.xlane.f32.xlu0 %v812
    %v814 = vpop.xlane.xlu0 %813
    %v815 = vsel %vm241, %v760, -inf
    %816 = vmax.xlane.f32.xlu0 %v815
    %v817 = vpop.xlane.xlu0 %816
    %v818 = vsel %vm241, %v763, -inf
    %819 = vmax.xlane.f32.xlu0 %v818
    %v820 = vpop.xlane.xlu0 %819
    %v821 = vsel %vm241, %v798, -inf
    %822 = vmax.xlane.f32.xlu0 %v821
    %v823 = vpop.xlane.xlu0 %822
    %v824 = vsel %vm241, %v801, -inf
    %825 = vmax.xlane.f32.xlu0 %v824
    %v826 = vpop.xlane.xlu0 %825
    %v827 = vsel %vm241, %v804, -inf
    %828 = vmax.xlane.f32.xlu0 %v827
    %v829 = vpop.xlane.xlu0 %828
    %v830 = vsel %vm241, %v807, -inf
    %831 = vmax.xlane.f32.xlu0 %v830
    %v832 = vpop.xlane.xlu0 %831
    %v833 = vsub.f32 %v754, %v811
    %v834 = vsub.f32 %v757, %v814
    %v835 = vsub.f32 %v760, %v817
    %v836 = vsub.f32 %v763, %v820
    %v837 = vsub.f32 %v798, %v823
    %v838 = vsub.f32 %v801, %v826
    %v839 = vsub.f32 %v804, %v829
    %v840 = vsub.f32 %v807, %v832
    %v841 = vmul.f32 %v833, 1.442695
    %v842 = vpow.pop %v841
    %v843 = vmul.f32 %v834, 1.442695
    %v844 = vpow.pop %v843
    %v845 = vmul.f32 %v835, 1.442695
    %v846 = vpow.pop %v845
    %v847 = vmul.f32 %v836, 1.442695
    %v848 = vpow.pop %v847
    %v849 = vmul.f32 %v837, 1.442695
    %v850 = vpow.pop %v849
    %v851 = vmul.f32 %v838, 1.442695
    %v852 = vpow.pop %v851
    %v853 = vmul.f32 %v839, 1.442695
    %v854 = vpow.pop %v853
    %v855 = vmul.f32 %v840, 1.442695
    %v856 = vpow.pop %v855
    %v857 = vsel %vm241, %v842, 0.0
    %858 = vadd.xlane.f32.xlu0 %v857
    %v859 = vpop.xlane.xlu0 %858
    %v860 = vsel %vm241, %v844, 0.0
    %861 = vadd.xlane.f32.xlu0 %v860
    %v862 = vpop.xlane.xlu0 %861
    %v863 = vsel %vm241, %v846, 0.0
    %864 = vadd.xlane.f32.xlu0 %v863
    %v865 = vpop.xlane.xlu0 %864
    %v866 = vsel %vm241, %v848, 0.0
    %867 = vadd.xlane.f32.xlu0 %v866
    %v868 = vpop.xlane.xlu0 %867
    %v869 = vsel %vm241, %v850, 0.0
    %870 = vadd.xlane.f32.xlu0 %v869
    %v871 = vpop.xlane.xlu0 %870
    %v872 = vsel %vm241, %v852, 0.0
    %873 = vadd.xlane.f32.xlu0 %v872
    %v874 = vpop.xlane.xlu0 %873
    %v875 = vsel %vm241, %v854, 0.0
    %876 = vadd.xlane.f32.xlu0 %v875
    %v877 = vpop.xlane.xlu0 %876
    %v878 = vsel %vm241, %v856, 0.0
    %879 = vadd.xlane.f32.xlu0 %v878
    %v880 = vpop.xlane.xlu0 %879
    %v881 = vrcp.pop %v859
    %v882 = vmul.f32 %v859, %v881
    %v883 = vsub.f32 1.0, %v882
    %v884 = vmul.f32 %v881, %v883
    %v885 = vadd.f32 %v881, %v884
    %vm886 = vweird.f32 %v859
    %vm887 = vweird.f32 %v881
    %vm888 = vmor %vm886, %vm887
    %v889 = vsel %vm888, %v881, %v885
    %v890 = vand.u32 2147483647, %v859
    %vm891 = vcmp.eq.f32.partialorder %v890, 8.507059e+37
    %v892 = vand.u32 %v859, 2147483648
    %v893 = vor.u32 1.1754944e-38, %v892
    %v894 = vsel %vm891, %v893, %v889
    %v895 = vmul.f32 %v842, %v894
    %v896 = vrcp.pop %v862
    %v897 = vmul.f32 %v862, %v896
    %v898 = vsub.f32 1.0, %v897
    %v899 = vmul.f32 %v896, %v898
    %v900 = vadd.f32 %v896, %v899
    %vm901 = vweird.f32 %v862
    %vm902 = vweird.f32 %v896
    %vm903 = vmor %vm901, %vm902
    %v904 = vsel %vm903, %v896, %v900
    %v905 = vand.u32 2147483647, %v862
    %vm906 = vcmp.eq.f32.partialorder %v905, 8.507059e+37
    %v907 = vand.u32 %v862, 2147483648
    %v908 = vor.u32 1.1754944e-38, %v907
    %v909 = vsel %vm906, %v908, %v904
    %v910 = vmul.f32 %v844, %v909
    %v911 = vrcp.pop %v865
    %v912 = vmul.f32 %v865, %v911
    %v913 = vsub.f32 1.0, %v912
    %v914 = vmul.f32 %v911, %v913
    %v915 = vadd.f32 %v911, %v914
    %vm916 = vweird.f32 %v865
    %vm917 = vweird.f32 %v911
    %vm918 = vmor %vm916, %vm917
    %v919 = vsel %vm918, %v911, %v915
    %v920 = vand.u32 2147483647, %v865
    %vm921 = vcmp.eq.f32.partialorder %v920, 8.507059e+37
    %v922 = vand.u32 %v865, 2147483648
    %v923 = vor.u32 1.1754944e-38, %v922
    %v924 = vsel %vm921, %v923, %v919
    %v925 = vmul.f32 %v846, %v924
    %v926 = vrcp.pop %v868
    %v927 = vmul.f32 %v868, %v926
    %v928 = vsub.f32 1.0, %v927
    %v929 = vmul.f32 %v926, %v928
    %v930 = vadd.f32 %v926, %v929
    %vm931 = vweird.f32 %v868
    %vm932 = vweird.f32 %v926
    %vm933 = vmor %vm931, %vm932
    %v934 = vsel %vm933, %v926, %v930
    %v935 = vand.u32 2147483647, %v868
    %vm936 = vcmp.eq.f32.partialorder %v935, 8.507059e+37
    %v937 = vand.u32 %v868, 2147483648
    %v938 = vor.u32 1.1754944e-38, %v937
    %v939 = vsel %vm936, %v938, %v934
    %v940 = vmul.f32 %v848, %v939
    %v941 = vrcp.pop %v871
    %v942 = vmul.f32 %v871, %v941
    %v943 = vsub.f32 1.0, %v942
    %v944 = vmul.f32 %v941, %v943
    %v945 = vadd.f32 %v941, %v944
    %vm946 = vweird.f32 %v871
    %vm947 = vweird.f32 %v941
    %vm948 = vmor %vm946, %vm947
    %v949 = vsel %vm948, %v941, %v945
    %v950 = vand.u32 2147483647, %v871
    %vm951 = vcmp.eq.f32.partialorder %v950, 8.507059e+37
    %v952 = vand.u32 %v871, 2147483648
    %v953 = vor.u32 1.1754944e-38, %v952
    %v954 = vsel %vm951, %v953, %v949
    %v955 = vmul.f32 %v850, %v954
    %v956 = vrcp.pop %v874
    %v957 = vmul.f32 %v874, %v956
    %v958 = vsub.f32 1.0, %v957
    %v959 = vmul.f32 %v956, %v958
    %v960 = vadd.f32 %v956, %v959
    %vm961 = vweird.f32 %v874
    %vm962 = vweird.f32 %v956
    %vm963 = vmor %vm961, %vm962
    %v964 = vsel %vm963, %v956, %v960
    %v965 = vand.u32 2147483647, %v874
    %vm966 = vcmp.eq.f32.partialorder %v965, 8.507059e+37
    %v967 = vand.u32 %v874, 2147483648
    %v968 = vor.u32 1.1754944e-38, %v967
    %v969 = vsel %vm966, %v968, %v964
    %v970 = vmul.f32 %v852, %v969
    %v971 = vrcp.pop %v877
    %v972 = vmul.f32 %v877, %v971
    %v973 = vsub.f32 1.0, %v972
    %v974 = vmul.f32 %v971, %v973
    %v975 = vadd.f32 %v971, %v974
    %vm976 = vweird.f32 %v877
    %vm977 = vweird.f32 %v971
    %vm978 = vmor %vm976, %vm977
    %v979 = vsel %vm978, %v971, %v975
    %v980 = vand.u32 2147483647, %v877
    %vm981 = vcmp.eq.f32.partialorder %v980, 8.507059e+37
    %v982 = vand.u32 %v877, 2147483648
    %v983 = vor.u32 1.1754944e-38, %v982
    %v984 = vsel %vm981, %v983, %v979
    %v985 = vmul.f32 %v854, %v984
    %v986 = vrcp.pop %v880
    %v987 = vmul.f32 %v880, %v986
    %v988 = vsub.f32 1.0, %v987
    %v989 = vmul.f32 %v986, %v988
    %v990 = vadd.f32 %v986, %v989
    %vm991 = vweird.f32 %v880
    %vm992 = vweird.f32 %v986
    %vm993 = vmor %vm991, %vm992
    %v994 = vsel %vm993, %v986, %v990
    %v995 = vand.u32 2147483647, %v880
    %vm996 = vcmp.eq.f32.partialorder %v995, 8.507059e+37
    %v997 = vand.u32 %v880, 2147483648
    %v998 = vor.u32 1.1754944e-38, %v997
    %v999 = vsel %vm996, %v998, %v994
    %v1000 = vmul.f32 %v856, %v999
    %1001 = vrot.lane.b32.xlu0 %v708, 96
    %v1002 = vpop.permute.xlu0 %1001
    %v1005 = vsel %vm241, %v895, 0
    %v1008 = vsel %vm241, %v910, 0
    %v1011 = vsel %vm241, %v925, 0
    %v1014 = vsel %vm241, %v940, 0
    %1016 = vmatpush.msra.mxu0 0.0
    %1017 = vmatpush.msra.mxu0 0.0
    %1018 = vmatpush.msra.mxu0 0.0
    %1019 = vmatpush.msra.mxu0 0.0
    %1020 = vmatpush.msra.mxu0 0.0
    %1021 = vmatpush.msra.mxu0 0.0
    %1022 = vmatpush.msra.mxu0 0.0
    %1023 = vmatpush.msra.mxu0 0.0
    %1024 = vmatpush.msra.mxu0 0.0
    %1025 = vmatpush.msra.mxu0 0.0
    %1026 = vmatpush.msra.mxu0 0.0
    %1027 = vmatpush.msra.mxu0 0.0
    %1028 = vmatpush.msra.mxu0 0.0
    %1029 = vmatpush.msra.mxu0 0.0
    %1030 = vmatpush.msra.mxu0 0.0
    %1031 = vmatpush.msra.mxu0 %v1002
    %1032 = vmatmul.f32.gmra.mxu0 %v1005
    %v1033 = vpop.f32.mrf.mxu0
    %v1034 = vadd.f32 0.0, %v1033
    %1035 = vmatmul.f32.gmra.mxu0 %v1008
    %v1036 = vpop.f32.mrf.mxu0
    %v1037 = vadd.f32 0.0, %v1036
    %1038 = vmatmul.f32.gmra.mxu0 %v1011
    %v1039 = vpop.f32.mrf.mxu0
    %v1040 = vadd.f32 0.0, %v1039
    %1041 = vmatmul.f32.gmra.mxu0 %v1014
    %v1042 = vpop.f32.mrf.mxu0
    %v1043 = vadd.f32 0.0, %v1042
    %1044 = vdwg.mxu0
    %1045 = vrot.lane.b32.xlu0 %v711, 96
    %v1046 = vpop.permute.xlu0 %1045
    %v1049 = vsel %vm241, %v955, 0
    %v1052 = vsel %vm241, %v970, 0
    %v1055 = vsel %vm241, %v985, 0
    %v1058 = vsel %vm241, %v1000, 0
    %1060 = vmatpush.msra.mxu0 0.0
    %1061 = vmatpush.msra.mxu0 0.0
    %1062 = vmatpush.msra.mxu0 0.0
    %1063 = vmatpush.msra.mxu0 0.0
    %1064 = vmatpush.msra.mxu0 0.0
    %1065 = vmatpush.msra.mxu0 0.0
    %1066 = vmatpush.msra.mxu0 0.0
    %1067 = vmatpush.msra.mxu0 0.0
    %1068 = vmatpush.msra.mxu0 0.0
    %1069 = vmatpush.msra.mxu0 0.0
    %1070 = vmatpush.msra.mxu0 0.0
    %1071 = vmatpush.msra.mxu0 0.0
    %1072 = vmatpush.msra.mxu0 0.0
    %1073 = vmatpush.msra.mxu0 0.0
    %1074 = vmatpush.msra.mxu0 0.0
    %1075 = vmatpush.msra.mxu0 %v1046
    %1076 = vmatmul.f32.gmra.mxu0 %v1049
    %v1077 = vpop.f32.mrf.mxu0
    %v1078 = vadd.f32 0.0, %v1077
    %1079 = vmatmul.f32.gmra.mxu0 %v1052
    %v1080 = vpop.f32.mrf.mxu0
    %v1081 = vadd.f32 0.0, %v1080
    %1082 = vmatmul.f32.gmra.mxu0 %v1055
    %v1083 = vpop.f32.mrf.mxu0
    %v1084 = vadd.f32 0.0, %v1083
    %1085 = vmatmul.f32.gmra.mxu0 %v1058
    %v1086 = vpop.f32.mrf.mxu0
    %v1087 = vadd.f32 0.0, %v1086
    %1088 = vdwg.mxu0
    %v1089 = vmul.f32 %v1034, %v137
    %v1090 = vmul.f32 %v1078, %v137
    %v1091 = vmul.f32 %v1037, %v140
    %v1092 = vmul.f32 %v1081, %v140
    %v1093 = vadd.f32 %v1089, %v1091
    %v1094 = vadd.f32 %v1090, %v1092
    %v1095 = vmul.f32 %v1040, %v143
    %v1096 = vmul.f32 %v1084, %v143
    %v1097 = vadd.f32 %v1093, %v1095
    %v1098 = vadd.f32 %v1094, %v1096
    %v1099 = vmul.f32 %v1043, %v146
    %v1100 = vmul.f32 %v1087, %v146
    %v1101 = vadd.f32 %v1097, %v1099
    %v1102 = vadd.f32 %v1098, %v1100
    %v1103 = vperm.slane %v92, 4
    %v1105 = vsel %vm107, %v1101, 0
    %v1108 = vsel %vm107, %v1102, 0
    %1110 = vmatpush.msra.mxu0 0.0
    %1111 = vmatpush.msra.mxu0 0.0
    %1112 = vmatpush.msra.mxu0 0.0
    %1113 = vmatpush.msra.mxu0 0.0
    %1114 = vmatpush.msra.mxu0 0.0
    %1115 = vmatpush.msra.mxu0 0.0
    %1116 = vmatpush.msra.mxu0 0.0
    %1117 = vmatpush.msra.mxu0 0.0
    %1118 = vmatpush.msra.mxu0 0.0
    %1119 = vmatpush.msra.mxu0 0.0
    %1120 = vmatpush.msra.mxu0 0.0
    %1121 = vmatpush.msra.mxu0 0.0
    %1122 = vmatpush.msra.mxu0 %v83
    %1123 = vmatpush.msra.mxu0 %v80
    %1124 = vmatpush.msra.mxu0 %v77
    %1125 = vmatpush.msra.mxu0 %v74
    %1126 = vmatmul.f32.gmra.mxu0 %v1105
    %v1127 = vpop.f32.mrf.mxu0
    %v1128 = vadd.f32 %v1103, %v1127
    %1129 = vmatmul.f32.gmra.mxu0 %v1108
    %v1130 = vpop.f32.mrf.mxu0
    %v1131 = vadd.f32 %v1103, %v1130
    %1132 = vdwg.mxu0
    %v1133 = vadd.f32 %v623, %v1128
    %v1134 = vadd.f32 %v624, %v1131
    %v1135 = vsel %vm107, %v1133, 0.0
    %1136 = vadd.xlane.f32.xlu0 %v1135
    %v1137 = vpop.xlane.xlu0 %1136
    %v1138 = vsel %vm107, %v1134, 0.0
    %1139 = vadd.xlane.f32.xlu0 %v1138
    %v1140 = vpop.xlane.xlu0 %1139
    %v1141 = vmul.f32 %v1137, %v580
    %v1142 = vmul.f32 %v1140, %v580
    %v1143 = vsub.f32 %v1133, %v1141
    %v1144 = vsub.f32 %v1134, %v1142
    %v1145 = vmul.f32 %v1143, %v1143
    %v1146 = vmul.f32 %v1144, %v1144
    %v1147 = vsel %vm107, %v1145, 0.0
    %1148 = vadd.xlane.f32.xlu0 %v1147
    %v1149 = vpop.xlane.xlu0 %1148
    %v1150 = vsel %vm107, %v1146, 0.0
    %1151 = vadd.xlane.f32.xlu0 %v1150
    %v1152 = vpop.xlane.xlu0 %1151
    %v1153 = vmul.f32 %v1149, %v580
    %v1154 = vmul.f32 %v1152, %v580
    %v1155 = vadd.f32 %v1153, 1e-05
    %v1156 = vadd.f32 %v1154, 1e-05
    %v1157 = vrsqrt.pop %v1155
    %v1158 = vmul.f32 %v1157, %v1155
    %v1159 = vmul.f32 %v1158, %v1157
    %v1160 = vmul.f32 0.5, %v1159
    %v1161 = vsub.f32 1.5, %v1160
    %v1162 = vmul.f32 %v1157, %v1161
    %vm1163 = vweird.f32 %v1155
    %vm1164 = vweird.f32 %v1157
    %vm1165 = vmor %vm1163, %vm1164
    %v1166 = vsel %vm1165, %v1157, %v1162
    %v1167 = vrsqrt.pop %v1156
    %v1168 = vmul.f32 %v1167, %v1156
    %v1169 = vmul.f32 %v1168, %v1167
    %v1170 = vmul.f32 0.5, %v1169
    %v1171 = vsub.f32 1.5, %v1170
    %v1172 = vmul.f32 %v1167, %v1171
    %vm1173 = vweird.f32 %v1156
    %vm1174 = vweird.f32 %v1167
    %vm1175 = vmor %vm1173, %vm1174
    %v1176 = vsel %vm1175, %v1167, %v1172
    %v1177 = vmul.f32 %v1143, %v1166
    %v1178 = vmul.f32 %v1144, %v1176
    %v1179 = vperm.slane %v93, 1
    %v1180 = vmul.f32 %v1177, %v1179
    %v1181 = vmul.f32 %v1178, %v1179
    %v1182 = vperm.slane %v93, 2
    %v1183 = vadd.f32 %v1180, %v1182
    %v1184 = vadd.f32 %v1181, %v1182
    %v1185 = vperm.slane %v92, 5
    %1190 = vrot.lane.b32.xlu0 %v74, 96
    %v1191 = vpop.permute.xlu0 %1190
    %1192 = vrot.lane.b32.xlu0 %v77, 96
    %v1193 = vpop.permute.xlu0 %1192
    %1194 = vrot.lane.b32.xlu0 %v80, 96
    %v1195 = vpop.permute.xlu0 %1194
    %1196 = vrot.lane.b32.xlu0 %v83, 96
    %v1197 = vpop.permute.xlu0 %1196
    %v1203 = vsel %vm107, %v1183, 0
    %v1206 = vsel %vm107, %v1184, 0
    %1208 = vmatpush.msra.mxu0 0.0
    %1209 = vmatpush.msra.mxu0 0.0
    %1210 = vmatpush.msra.mxu0 0.0
    %1211 = vmatpush.msra.mxu0 0.0
    %1212 = vmatpush.msra.mxu0 0.0
    %1213 = vmatpush.msra.mxu0 0.0
    %1214 = vmatpush.msra.mxu0 0.0
    %1215 = vmatpush.msra.mxu0 0.0
    %1216 = vmatpush.msra.mxu0 0.0
    %1217 = vmatpush.msra.mxu0 0.0
    %1218 = vmatpush.msra.mxu0 0.0
    %1219 = vmatpush.msra.mxu0 0.0
    %1220 = vmatpush.msra.mxu0 %v1197
    %1221 = vmatpush.msra.mxu0 %v1195
    %1222 = vmatpush.msra.mxu0 %v1193
    %1223 = vmatpush.msra.mxu0 %v1191
    %1224 = vmatmul.f32.gmra.mxu0 %v1203
    %v1225 = vpop.f32.mrf.mxu0
    %v1226 = vadd.f32 %v1185, %v1225
    %1227 = vmatmul.f32.gmra.mxu0 %v1206
    %v1228 = vpop.f32.mrf.mxu0
    %v1229 = vadd.f32 %v1185, %v1228
    %1230 = vdwg.mxu0
    %v1231 = vmax.f32 %v1226, 0.0
    %v1232 = vmax.f32 %v1229, 0.0
    %v1233 = vperm.slane %v92, 6
    %vm1234 = vcmask 523264
    %v1236 = vsel %vm1234, %v1231, 0
    %v1239 = vsel %vm1234, %v1232, 0
    %1241 = vmatpush.msra.mxu0 0.0
    %1242 = vmatpush.msra.mxu0 0.0
    %1243 = vmatpush.msra.mxu0 0.0
    %1244 = vmatpush.msra.mxu0 0.0
    %1245 = vmatpush.msra.mxu0 0.0
    %1246 = vmatpush.msra.mxu0 0.0
    %1247 = vmatpush.msra.mxu0 0.0
    %1248 = vmatpush.msra.mxu0 0.0
    %1249 = vmatpush.msra.mxu0 %v91
    %1250 = vmatpush.msra.mxu0 %v90
    %1251 = vmatpush.msra.mxu0 %v89
    %1252 = vmatpush.msra.mxu0 %v88
    %1253 = vmatpush.msra.mxu0 %v87
    %1254 = vmatpush.msra.mxu0 %v86
    %1255 = vmatpush.msra.mxu0 %v85
    %1256 = vmatpush.msra.mxu0 %v84
    %1257 = vmatmul.f32.gmra.mxu0 %v1236
    %v1258 = vpop.f32.mrf.mxu0
    %v1259 = vadd.f32 %v1233, %v1258
    %1260 = vmatmul.f32.gmra.mxu0 %v1239
    %v1261 = vpop.f32.mrf.mxu0
    %v1262 = vadd.f32 %v1233, %v1261
    %1263 = vdwg.mxu0
    %v1264 = vadd.f32 %v1183, %v1259
    %v1265 = vadd.f32 %v1184, %v1262
    %v1266 = vsel %vm107, %v1264, 0.0
    %1267 = vadd.xlane.f32.xlu0 %v1266
    %v1268 = vpop.xlane.xlu0 %1267
    %v1269 = vsel %vm107, %v1265, 0.0
    %1270 = vadd.xlane.f32.xlu0 %v1269
    %v1271 = vpop.xlane.xlu0 %1270
    %v1272 = vmul.f32 %v1268, %v580
    %v1273 = vmul.f32 %v1271, %v580
    %v1274 = vsub.f32 %v1264, %v1272
    %v1275 = vsub.f32 %v1265, %v1273
    %v1276 = vmul.f32 %v1274, %v1274
    %v1277 = vmul.f32 %v1275, %v1275
    %v1278 = vsel %vm107, %v1276, 0.0
    %1279 = vadd.xlane.f32.xlu0 %v1278
    %v1280 = vpop.xlane.xlu0 %1279
    %v1281 = vsel %vm107, %v1277, 0.0
    %1282 = vadd.xlane.f32.xlu0 %v1281
    %v1283 = vpop.xlane.xlu0 %1282
    %v1284 = vmul.f32 %v1280, %v580
    %v1285 = vmul.f32 %v1283, %v580
    %v1286 = vadd.f32 %v1284, 1e-05
    %v1287 = vadd.f32 %v1285, 1e-05
    %v1288 = vrsqrt.pop %v1286
    %v1289 = vmul.f32 %v1288, %v1286
    %v1290 = vmul.f32 %v1289, %v1288
    %v1291 = vmul.f32 0.5, %v1290
    %v1292 = vsub.f32 1.5, %v1291
    %v1293 = vmul.f32 %v1288, %v1292
    %vm1294 = vweird.f32 %v1286
    %vm1295 = vweird.f32 %v1288
    %vm1296 = vmor %vm1294, %vm1295
    %v1297 = vsel %vm1296, %v1288, %v1293
    %v1298 = vrsqrt.pop %v1287
    %v1299 = vmul.f32 %v1298, %v1287
    %v1300 = vmul.f32 %v1299, %v1298
    %v1301 = vmul.f32 0.5, %v1300
    %v1302 = vsub.f32 1.5, %v1301
    %v1303 = vmul.f32 %v1298, %v1302
    %vm1304 = vweird.f32 %v1287
    %vm1305 = vweird.f32 %v1298
    %vm1306 = vmor %vm1304, %vm1305
    %v1307 = vsel %vm1306, %v1298, %v1303
    %v1308 = vmul.f32 %v1274, %v1297
    %v1309 = vmul.f32 %v1275, %v1307
    %v1310 = vperm.slane %v93, 3
    %v1311 = vmul.f32 %v1308, %v1310
    %v1312 = vmul.f32 %v1309, %v1310
    %v1313 = vperm.slane %v93, 4
    %v1314 = vadd.f32 %v1311, %v1313
    %v1315 = vadd.f32 %v1312, %v1313
    %1316 = vst.msk [vmem:[#allocation8] sm:$0xff] %vm107, %v1314
    %1317 = vst.msk [vmem:[#allocation8 + $0x8] sm:$0xff] %vm107, %v1315
    // Predicated region
    $region34: #{decoder_layer.1} parent=1 // pred_check
      _
    $region35: #{decoder_layer.1} parent=1 // pred_check_branch
      %1319 = sbr.rel (0) target = $region37
    $region36: #{decoder_layer.1} parent=1 // pred_region
      %1321 = vsyncadd [#allocation4], 0
      %s1322 = sshll.u32 [#allocation8], 4
      %s1323 = int_to_ptr.vmem [resolvable:$true] %s1322
      %s1324 = sshll.u32 %s5, 4
      %s1325 = int_to_ptr.hbm [resolvable:$true] %s1324
      %1330 = dma.vmem_to_hbm [thread:$0]  %s1323, 256, %s1325, [#allocation4], 128, 128, 8
    $region37: #{decoder_layer.1} parent=1 // pred_fallthru
      _
    // Predicated region
    $region38: #{decoder_layer.1} parent=1 // pred_check
      _
    $region39: #{decoder_layer.1} parent=1 // pred_check_branch
      %1332 = sbr.rel (0) target = $region41
    $region40: #{decoder_layer.1} parent=1 // pred_region
      %1334 = dma.done [#allocation4], 256
    $region41: #{decoder_layer.1} parent=1 // pred_fallthru
      _
    %1335 = vsyncpa [#allocation3], 1
    %1336 = vsyncpa [#allocation6], 1
    %1337 = vsyncpa [#allocation4], 1

</llo_original>
